<compile_context>
chip_gen: v7x
topology: tpu7x:2x2x1
jax: 0.10.0
libtpu: 0.0.40
codegen_flags: <defaults>
</compile_context>

<pallas_src>
import jax
import jax.numpy as jnp
from jax.experimental import pallas as pl
from jax.experimental.pallas import tpu as pltpu

LAYER_DIMS = [784, 512, 256, 128, 64, 10]


def mlp_kernel(x_ref, w1_ref, w2345_ref, b_ref, o_ref):
    # x_ref:     (TM, 784)  f32   batch tile
    # w1_ref:    (784, 512) bf16  W1
    # w2345_ref: (512, 384) bf16  fused slab:
    #              [:, 0:256]         = W2 (512, 256)
    #              [0:256,   256:384] = W3 (256, 128)
    #              [256:384, 256:384] = W4 (128, 64)  lane-padded to 128
    #              [384:512, 256:384] = W5 (64, 10)   padded to (128, 128)
    # b_ref:     (8, 512)   f32   row i = bias of layer i+1, zero padded
    # o_ref:     (TM, 10)   f32   logits
    f32 = jnp.float32
    h = x_ref[...]

    # linear1 (784 -> 512) + ReLU
    h = jnp.dot(h, w1_ref[...].astype(f32), preferred_element_type=f32)
    h = jnp.maximum(h + b_ref[0:1, :512], 0.0)

    # linear2 (512 -> 256) + ReLU
    h = jnp.dot(h, w2345_ref[:, 0:256].astype(f32), preferred_element_type=f32)
    h = jnp.maximum(h + b_ref[1:2, :256], 0.0)

    # linear3 (256 -> 128) + ReLU
    h = jnp.dot(h, w2345_ref[0:256, 256:384].astype(f32), preferred_element_type=f32)
    h = jnp.maximum(h + b_ref[2:3, :128], 0.0)

    # linear4 (128 -> 64, lane-padded to 128) + ReLU.
    # Padded lanes stay exactly 0: W4 cols 64:128 and bias row 3 lanes 64:128
    # are zero, and relu(0) == 0.
    h = jnp.dot(h, w2345_ref[256:384, 256:384].astype(f32), preferred_element_type=f32)
    h = jnp.maximum(h + b_ref[3:4, :128], 0.0)

    # linear5 (64 -> 10, lane-padded to 128), no activation
    h = jnp.dot(h, w2345_ref[384:512, 256:384].astype(f32), preferred_element_type=f32)
    h = h + b_ref[4:5, :128]

    o_ref[...] = h[:, :10].astype(o_ref.dtype)


def pack_params(params):
    """One-time packing: W1 as bf16, W2..W5 fused into a lane-padded (512, 384)
    bf16 slab, and all biases in a single zero-padded (8, 512) f32 buffer.

    Zero-padding invariants the kernel relies on (keep them if editing, e.g.
    when switching to quantized packing with nonzero zero-points):
      * slab[256:384, 320:384] == 0                      (W4 output lanes 64:128)
      * slab[384:512, 266:384] == 0, slab[448:512, :] == 0  (W5 padding)
      * bias row 3 lanes 64:512 == 0, bias row 4 lanes 10:512 == 0
    Together with relu(0) == 0 these keep the padded lanes of the layer-4/5
    activations exactly zero.
    """
    (w1, b1), (w2, b2), (w3, b3), (w4, b4), (w5, b5) = params
    assert w1.shape == (784, 512) and w2.shape == (512, 256)
    assert w3.shape == (256, 128) and w4.shape == (128, 64) and w5.shape == (64, 10)

    w1 = w1.astype(jnp.bfloat16)

    slab = jnp.zeros((512, 384), jnp.bfloat16)
    slab = slab.at[:, 0:256].set(w2.astype(jnp.bfloat16))            # W2
    slab = slab.at[0:256, 256:384].set(w3.astype(jnp.bfloat16))      # W3
    slab = slab.at[256:384, 256:320].set(w4.astype(jnp.bfloat16))    # W4 (pad cols)
    slab = slab.at[384:448, 256:266].set(w5.astype(jnp.bfloat16))    # W5 (pad rows+cols)

    bias = jnp.zeros((8, 512), jnp.float32)
    bias = bias.at[0, :512].set(b1)
    bias = bias.at[1, :256].set(b2)
    bias = bias.at[2, :128].set(b3)
    bias = bias.at[3, :64].set(b4)
    bias = bias.at[4, :10].set(b5)
    return w1, slab, bias


def multi_classification_forward(x, packed):
    """x: (B, C, H, W) float32 with C*H*W == 784. Returns (B, 10) f32 logits."""
    w1, w2345, bias = packed
    b = x.shape[0]
    x2d = x.reshape(b, -1)  # row-major flatten == torch .view((-1, 784)); no cast/pad
    assert x2d.shape[1] == 784

    # Batch tile: full batch when small (full-dim blocks are exempt from the
    # (8,128) rule), otherwise 512-row tiles (divisible by 8); Pallas masks the
    # ragged trailing tile.  Rows are independent so masking is safe.
    tm = b if b <= 512 else 512
    grid = (pl.cdiv(b, tm),)

    flops = 2 * b * (784 * 512 + 512 * 256 + 256 * 128 + 128 * 128 + 128 * 128)
    bytes_accessed = (
        2 * (784 * 512 + 512 * 384)   # bf16 weights
        + 4 * 8 * 512                 # f32 bias pack
        + 4 * b * 784                 # f32 input
        + 4 * b * 10                  # f32 output
    )

    return pl.pallas_call(
        mlp_kernel,
        out_shape=jax.ShapeDtypeStruct((b, 10), jnp.float32),
        grid_spec=pltpu.PrefetchScalarGridSpec(
            num_scalar_prefetch=0,
            grid=grid,
            in_specs=[
                pl.BlockSpec((tm, 784), lambda i: (i, 0)),    # x batch tile
                pl.BlockSpec((784, 512), lambda i: (0, 0)),   # W1 (VMEM-resident)
                pl.BlockSpec((512, 384), lambda i: (0, 0)),   # W2..W5 slab (resident)
                pl.BlockSpec((8, 512), lambda i: (0, 0)),     # biases (resident)
            ],
            out_specs=pl.BlockSpec((tm, 10), lambda i: (i, 0)),
        ),
        compiler_params=pltpu.CompilerParams(
            dimension_semantics=("parallel",)),
        cost_estimate=pl.CostEstimate(
            flops=flops, transcendentals=0, bytes_accessed=bytes_accessed),
    )(x2d, w1, w2345, bias)


def init_params(key):
    """Deterministic init mimicking torch.nn.Linear defaults (uniform ±1/sqrt(fan_in))."""
    params = []
    for i in range(len(LAYER_DIMS) - 1):
        fan_in, fan_out = LAYER_DIMS[i], LAYER_DIMS[i + 1]
        key, kw, kb = jax.random.split(key, 3)
        bound = 1.0 / jnp.sqrt(fan_in)
        w = jax.random.uniform(kw, (fan_in, fan_out), jnp.float32, -bound, bound)
        bias = jax.random.uniform(kb, (fan_out,), jnp.float32, -bound, bound)
        params.append((w, bias))
    return params


def reference_forward_f32(x, params):
    """Pure f32 reference (mirrors the PyTorch module)."""
    h = x.reshape(x.shape[0], -1)
    for i, (w, bias) in enumerate(params):
        h = h @ w + bias
        if i < len(params) - 1:
            h = jnp.maximum(h, 0.0)
    return h


def reference_forward_matched(x, params):
    """Mirrors the kernel numerics: bf16-rounded weights, f32 activations."""
    h = x.reshape(x.shape[0], -1)
    for i, (w, bias) in enumerate(params):
        w32 = w.astype(jnp.bfloat16).astype(jnp.float32)
        h = jnp.dot(h, w32, precision=jax.lax.Precision.HIGHEST) + bias
        if i < len(params) - 1:
            h = jnp.maximum(h, 0.0)
    return h


if __name__ == "__main__":
    key = jax.random.PRNGKey(0)
    kx, kp = jax.random.split(key)

    # (B, C, H, W) = (2, 4, 14, 14) -> 4*14*14 = 784 features after flattening
    x = jax.random.normal(kx, (2, 4, 14, 14), jnp.float32)
    params = init_params(kp)
    packed = pack_params(params)

    out = multi_classification_forward(x, packed)
    out = jax.block_until_ready(out)

    assert out.shape == (2, 10)
    ref_matched = reference_forward_matched(x, params)
    ref_f32 = reference_forward_f32(x, params)
    assert jnp.allclose(out, ref_matched, atol=2e-2, rtol=2e-2), \
        "mismatch vs numerics-matched reference"
    assert jnp.allclose(out, ref_f32, atol=5e-2, rtol=5e-2), \
        "mismatch vs f32 reference"

    print("KERNEL_OK")
</pallas_src>

<mosaic_0001>
module attributes {stable_mosaic.version = 11 : i64} {
  func.func @mlp_kernel(%arg0: i32, %arg1: memref<2x784xf32, #tpu.memory_space<vmem>>, %arg2: memref<784x512xbf16, #tpu.memory_space<vmem>>, %arg3: memref<512x384xbf16, #tpu.memory_space<vmem>>, %arg4: memref<8x512xf32, #tpu.memory_space<vmem>>, %arg5: memref<2x10xf32, #tpu.memory_space<vmem>>) attributes {dimension_semantics = [#tpu.dimension_semantics<parallel>], iteration_bounds = array<i64: 1>, scalar_prefetch = 0 : i64, scratch_operands = 0 : i64, tpu.core_type = #tpu.core_type<tc>, window_params = [{transform_indices = @transform_0, window_bounds = array<i64: 2, 784>}, {pipeline_mode = #tpu.pipeline_mode<synchronous>, transform_indices = @transform_1, window_bounds = array<i64: 784, 512>}, {pipeline_mode = #tpu.pipeline_mode<synchronous>, transform_indices = @transform_2, window_bounds = array<i64: 512, 384>}, {pipeline_mode = #tpu.pipeline_mode<synchronous>, transform_indices = @transform_3, window_bounds = array<i64: 8, 512>}, {transform_indices = @transform_4, window_bounds = array<i64: 2, 10>}]} {
    %c0 = arith.constant 0 : index
    %c0_0 = arith.constant 0 : index
    %0 = vector.load %arg1[%c0, %c0_0] : memref<2x784xf32, #tpu.memory_space<vmem>>, vector<2x784xf32>
    %c0_1 = arith.constant 0 : index
    %c0_2 = arith.constant 0 : index
    %1 = vector.load %arg2[%c0_1, %c0_2] : memref<784x512xbf16, #tpu.memory_space<vmem>>, vector<784x512xbf16>
    %2 = arith.extf %1 : vector<784x512xbf16> to vector<784x512xf32>
    %cst = arith.constant dense<0.000000e+00> : vector<2x512xf32>
    %3 = tpu.matmul %0, %2, %cst {dimension_numbers = #tpu.dot_dimension_numbers<[1], [0], [0], [1], [0, 0, 1, 1], [], []>} : vector<2x784xf32>, vector<784x512xf32>, vector<2x512xf32> -> vector<2x512xf32>
    %c0_3 = arith.constant 0 : index
    %c0_4 = arith.constant 0 : index
    %4 = vector.load %arg4[%c0_3, %c0_4] : memref<8x512xf32, #tpu.memory_space<vmem>>, vector<1x512xf32>
    %5 = vector.broadcast %4 : vector<1x512xf32> to vector<2x512xf32>
    %6 = arith.addf %3, %5 : vector<2x512xf32>
    %cst_5 = arith.constant 0.000000e+00 : f32
    %7 = vector.broadcast %cst_5 : f32 to vector<2x512xf32>
    %8 = arith.maximumf %6, %7 : vector<2x512xf32>
    %c0_6 = arith.constant 0 : index
    %c0_7 = arith.constant 0 : index
    %9 = vector.load %arg3[%c0_6, %c0_7] : memref<512x384xbf16, #tpu.memory_space<vmem>>, vector<512x256xbf16>
    %10 = arith.extf %9 : vector<512x256xbf16> to vector<512x256xf32>
    %cst_8 = arith.constant dense<0.000000e+00> : vector<2x256xf32>
    %11 = tpu.matmul %8, %10, %cst_8 {dimension_numbers = #tpu.dot_dimension_numbers<[1], [0], [0], [1], [0, 0, 1, 1], [], []>} : vector<2x512xf32>, vector<512x256xf32>, vector<2x256xf32> -> vector<2x256xf32>
    %c1 = arith.constant 1 : index
    %c0_9 = arith.constant 0 : index
    %12 = vector.load %arg4[%c1, %c0_9] : memref<8x512xf32, #tpu.memory_space<vmem>>, vector<1x256xf32>
    %13 = vector.broadcast %12 : vector<1x256xf32> to vector<2x256xf32>
    %14 = arith.addf %11, %13 : vector<2x256xf32>
    %cst_10 = arith.constant 0.000000e+00 : f32
    %15 = vector.broadcast %cst_10 : f32 to vector<2x256xf32>
    %16 = arith.maximumf %14, %15 : vector<2x256xf32>
    %c0_11 = arith.constant 0 : index
    %c256 = arith.constant 256 : index
    %17 = vector.load %arg3[%c0_11, %c256] : memref<512x384xbf16, #tpu.memory_space<vmem>>, vector<256x128xbf16>
    %18 = arith.extf %17 : vector<256x128xbf16> to vector<256x128xf32>
    %cst_12 = arith.constant dense<0.000000e+00> : vector<2x128xf32>
    %19 = tpu.matmul %16, %18, %cst_12 {dimension_numbers = #tpu.dot_dimension_numbers<[1], [0], [0], [1], [0, 0, 1, 1], [], []>} : vector<2x256xf32>, vector<256x128xf32>, vector<2x128xf32> -> vector<2x128xf32>
    %c2 = arith.constant 2 : index
    %c0_13 = arith.constant 0 : index
    %20 = vector.load %arg4[%c2, %c0_13] : memref<8x512xf32, #tpu.memory_space<vmem>>, vector<1x128xf32>
    %21 = vector.broadcast %20 : vector<1x128xf32> to vector<2x128xf32>
    %22 = arith.addf %19, %21 : vector<2x128xf32>
    %cst_14 = arith.constant 0.000000e+00 : f32
    %23 = vector.broadcast %cst_14 : f32 to vector<2x128xf32>
    %24 = arith.maximumf %22, %23 : vector<2x128xf32>
    %c256_15 = arith.constant 256 : index
    %c256_16 = arith.constant 256 : index
    %25 = vector.load %arg3[%c256_15, %c256_16] : memref<512x384xbf16, #tpu.memory_space<vmem>>, vector<128x128xbf16>
    %26 = arith.extf %25 : vector<128x128xbf16> to vector<128x128xf32>
    %cst_17 = arith.constant dense<0.000000e+00> : vector<2x128xf32>
    %27 = tpu.matmul %24, %26, %cst_17 {dimension_numbers = #tpu.dot_dimension_numbers<[1], [0], [0], [1], [0, 0, 1, 1], [], []>} : vector<2x128xf32>, vector<128x128xf32>, vector<2x128xf32> -> vector<2x128xf32>
    %c3 = arith.constant 3 : index
    %c0_18 = arith.constant 0 : index
    %28 = vector.load %arg4[%c3, %c0_18] : memref<8x512xf32, #tpu.memory_space<vmem>>, vector<1x128xf32>
    %29 = vector.broadcast %28 : vector<1x128xf32> to vector<2x128xf32>
    %30 = arith.addf %27, %29 : vector<2x128xf32>
    %cst_19 = arith.constant 0.000000e+00 : f32
    %31 = vector.broadcast %cst_19 : f32 to vector<2x128xf32>
    %32 = arith.maximumf %30, %31 : vector<2x128xf32>
    %c384 = arith.constant 384 : index
    %c256_20 = arith.constant 256 : index
    %33 = vector.load %arg3[%c384, %c256_20] : memref<512x384xbf16, #tpu.memory_space<vmem>>, vector<128x128xbf16>
    %34 = arith.extf %33 : vector<128x128xbf16> to vector<128x128xf32>
    %cst_21 = arith.constant dense<0.000000e+00> : vector<2x128xf32>
    %35 = tpu.matmul %32, %34, %cst_21 {dimension_numbers = #tpu.dot_dimension_numbers<[1], [0], [0], [1], [0, 0, 1, 1], [], []>} : vector<2x128xf32>, vector<128x128xf32>, vector<2x128xf32> -> vector<2x128xf32>
    %c4 = arith.constant 4 : index
    %c0_22 = arith.constant 0 : index
    %36 = vector.load %arg4[%c4, %c0_22] : memref<8x512xf32, #tpu.memory_space<vmem>>, vector<1x128xf32>
    %37 = vector.broadcast %36 : vector<1x128xf32> to vector<2x128xf32>
    %38 = arith.addf %35, %37 : vector<2x128xf32>
    %39 = vector.extract_strided_slice %38 {offsets = [0, 0], sizes = [2, 10], strides = [1, 1]} : vector<2x128xf32> to vector<2x10xf32>
    %c0_23 = arith.constant 0 : index
    %c0_24 = arith.constant 0 : index
    %40 = vector.load %arg5[%c0_23, %c0_24] : memref<2x10xf32, #tpu.memory_space<vmem>>, vector<2x10xf32>
    tpu.vector_store %arg5[%c0_23, %c0_24], %39 {strides = array<i32>} : memref<2x10xf32, #tpu.memory_space<vmem>>, vector<2x10xf32>,
    return
  }
  func.func @transform_0(%arg0: i32) -> (i32, i32) {
    %c0_i32 = arith.constant 0 : i32
    %c0_i32_0 = arith.constant 0 : i32
    return %arg0, %c0_i32 : i32, i32
  }
  func.func @transform_1(%arg0: i32) -> (i32, i32) {
    %c0_i32 = arith.constant 0 : i32
    %c0_i32_0 = arith.constant 0 : i32
    %c0_i32_1 = arith.constant 0 : i32
    return %c0_i32, %c0_i32_0 : i32, i32
  }
  func.func @transform_2(%arg0: i32) -> (i32, i32) {
    %c0_i32 = arith.constant 0 : i32
    %c0_i32_0 = arith.constant 0 : i32
    %c0_i32_1 = arith.constant 0 : i32
    return %c0_i32, %c0_i32_0 : i32, i32
  }
  func.func @transform_3(%arg0: i32) -> (i32, i32) {
    %c0_i32 = arith.constant 0 : i32
    %c0_i32_0 = arith.constant 0 : i32
    %c0_i32_1 = arith.constant 0 : i32
    return %c0_i32, %c0_i32_0 : i32, i32
  }
  func.func @transform_4(%arg0: i32) -> (i32, i32) {
    %c0_i32 = arith.constant 0 : i32
    %c0_i32_0 = arith.constant 0 : i32
    return %arg0, %c0_i32 : i32, i32
  }
}

</mosaic_0001>

<llo_original>
// kernel: tpu_custom_call.1
$region0: #{tpu_custom_call.1}
  #allocation0 [shape = 'u32[]', space=smem, size = 0x4, offset = 0x4, fixed_abs, tag = 'smem constant byte address 0x4 - core index']
  #allocation1 [shape = 'u32[144,128]{1,0:T(1,128)}', space=vmem, size = 0x12000, scoped, tag = 'internal scratch']
  %s0 = inlined_call_operand.hbm [shape: f32[2,784], index: 0, kind: input, shape index: {}]
  %s1 = inlined_call_operand.hbm [shape: bf16[784,512], index: 1, kind: input, shape index: {}]
  %s2 = inlined_call_operand.hbm [shape: bf16[512,384], index: 2, kind: input, shape index: {}]
  %s3 = inlined_call_operand.hbm [shape: f32[8,512], index: 3, kind: input, shape index: {}]
  %s4 = inlined_call_operand.hbm [shape: f32[2,10], index: 4, kind: output, shape index: {}]
  %s5 = sld [smem:[#allocation0]]
  $region42: #{tpu_custom_call.1} parent=0
    _
  %s7 = ssub.s32 1, %s5
  %s8 = scalar_select 0, %s7, %s5
  $region1: #{tpu_custom_call.1} parent=0
    #allocation2 [shape = 'u8[7168]{0}', space=vmem, size = 0x1c00, scoped, tag = 'input window, operand 0, single buffered']
    #allocation3 [shape = 's32[1]{0}', space=sflag, size = 0x4, scoped, tag = 'scoped memory for tpu_custom_call.1']
    #allocation4 [shape = 's32[1]{0}', space=sflag, size = 0x4, scoped, tag = 'scoped memory for tpu_custom_call.1']
    #allocation5 [shape = 'u8[802816]{0}', space=vmem, size = 0xc4000, scoped, tag = 'input window, operand 1, single buffered']
    #allocation6 [shape = 's32[1]{0}', space=sflag, size = 0x4, scoped, tag = 'scoped memory for tpu_custom_call.1']
    #allocation7 [shape = 'u8[393216]{0}', space=vmem, size = 0x60000, scoped, tag = 'input window, operand 2, single buffered']
    #allocation8 [shape = 'u8[16384]{0}', space=vmem, size = 0x4000, scoped, tag = 'input window, operand 3, single buffered']
    #allocation9 [shape = 's32[1]{0}', space=sflag, size = 0x4, scoped, tag = 'scoped memory for tpu_custom_call.1']
    #allocation10 [shape = 'u8[1024]{0}', space=vmem, size = 0x400, scoped, tag = 'output window, operand 0, single buffered']
    %9 = vsyncpa [#allocation3], 0
    %10 = vsyncpa [#allocation6], 0
    %11 = vsyncpa [#allocation9], 0
    %12 = vsyncpa [#allocation4], 0
    // Predicated region
    $region2: #{tpu_custom_call.1} parent=1 // pred_check
      _
    $region3: #{tpu_custom_call.1} parent=1 // pred_check_branch
      %14 = sbr.rel (0) target = $region5
    $region4: #{tpu_custom_call.1} parent=1 // pred_region
      %s16 = ssub.s32 224, 224
      %17 = vsyncadd [#allocation3], %s16
      %s19 = sshll.u32 [#allocation2], 4
      %s20 = int_to_ptr.vmem [resolvable:$true] %s19
      %22 = dma.hbm_to_vmem [thread:$0]  %s0, 224, %s20, [#allocation3]
    $region5: #{tpu_custom_call.1} parent=1 // pred_fallthru
      _
    // Predicated region
    $region6: #{tpu_custom_call.1} parent=1 // pred_check
      _
    $region7: #{tpu_custom_call.1} parent=1 // pred_check_branch
      %24 = sbr.rel (0) target = $region9
    $region8: #{tpu_custom_call.1} parent=1 // pred_region
      %s26 = ssub.s32 25088, 25088
      %27 = vsyncadd [#allocation6], %s26
      %s28 = sshll.u32 [#allocation5], 4
      %s29 = int_to_ptr.vmem [resolvable:$true] %s28
      %34 = dma.hbm_to_vmem [thread:$0]  %s1, 25088, %s29, [#allocation6], 256, 256, 16
    $region9: #{tpu_custom_call.1} parent=1 // pred_fallthru
      _
    // Predicated region
    $region10: #{tpu_custom_call.1} parent=1 // pred_check
      _
    $region11: #{tpu_custom_call.1} parent=1 // pred_check_branch
      %36 = sbr.rel (0) target = $region13
    $region12: #{tpu_custom_call.1} parent=1 // pred_region
      %s38 = ssub.s32 12288, 12288
      %39 = vsyncadd [#allocation6], %s38
      %s40 = sshll.u32 [#allocation7], 4
      %s41 = int_to_ptr.vmem [resolvable:$true] %s40
      %46 = dma.hbm_to_vmem [thread:$0]  %s2, 12288, %s41, [#allocation6], 192, 192, 12
    $region13: #{tpu_custom_call.1} parent=1 // pred_fallthru
      _
    // Predicated region
    $region14: #{tpu_custom_call.1} parent=1 // pred_check
      _
    $region15: #{tpu_custom_call.1} parent=1 // pred_check_branch
      %48 = sbr.rel (0) target = $region17
    $region16: #{tpu_custom_call.1} parent=1 // pred_region
      %s50 = ssub.s32 512, 512
      %51 = vsyncadd [#allocation9], %s50
      %s53 = sshll.u32 [#allocation8], 4
      %s54 = int_to_ptr.vmem [resolvable:$true] %s53
      %56 = dma.hbm_to_vmem [thread:$0]  %s3, 512, %s54, [#allocation9]
    $region17: #{tpu_custom_call.1} parent=1 // pred_fallthru
      _
    // Predicated region
    $region18: #{tpu_custom_call.1} parent=1 // pred_check
      _
    $region19: #{tpu_custom_call.1} parent=1 // pred_check_branch
      %58 = sbr.rel (0) target = $region21
    $region20: #{tpu_custom_call.1} parent=1 // pred_region
      %59 = dma.done [#allocation3], 224
    $region21: #{tpu_custom_call.1} parent=1 // pred_fallthru
      _
    // Predicated region
    $region22: #{tpu_custom_call.1} parent=1 // pred_check
      _
    $region23: #{tpu_custom_call.1} parent=1 // pred_check_branch
      %61 = sbr.rel (0) target = $region25
    $region24: #{tpu_custom_call.1} parent=1 // pred_region
      %62 = dma.done [#allocation6], 25088
    $region25: #{tpu_custom_call.1} parent=1 // pred_fallthru
      _
    // Predicated region
    $region26: #{tpu_custom_call.1} parent=1 // pred_check
      _
    $region27: #{tpu_custom_call.1} parent=1 // pred_check_branch
      %64 = sbr.rel (0) target = $region29
    $region28: #{tpu_custom_call.1} parent=1 // pred_region
      %65 = dma.done [#allocation6], 12288
    $region29: #{tpu_custom_call.1} parent=1 // pred_fallthru
      _
    // Predicated region
    $region30: #{tpu_custom_call.1} parent=1 // pred_check
      _
    $region31: #{tpu_custom_call.1} parent=1 // pred_check_branch
      %67 = sbr.rel (0) target = $region33
    $region32: #{tpu_custom_call.1} parent=1 // pred_region
      %68 = dma.done [#allocation9], 512
    $region33: #{tpu_custom_call.1} parent=1 // pred_fallthru
      _
    %v69 = vld [vmem:[#allocation2] sm:$0xff]
    %v70 = vld [vmem:[#allocation2 + $0x8] sm:$0x3f]
    %v71 = vld [vmem:[#allocation5] sm:$0xff]
    %v72 = vld [vmem:[#allocation5 + $0x8] sm:$0xff]
    %v73 = vld [vmem:[#allocation5 + $0x10] sm:$0xff]
    %v74 = vld [vmem:[#allocation5 + $0x18] sm:$0xff]
    %v75 = vld [vmem:[#allocation5 + $0x20] sm:$0xff]
    %v76 = vld [vmem:[#allocation5 + $0x28] sm:$0xff]
    %v77 = vld [vmem:[#allocation5 + $0x30] sm:$0xff]
    %v78 = vld [vmem:[#allocation5 + $0x38] sm:$0xff]
    %v79 = vld [vmem:[#allocation5 + $0x40] sm:$0xff]
    %v80 = vld [vmem:[#allocation5 + $0x48] sm:$0xff]
    %v81 = vld [vmem:[#allocation5 + $0x50] sm:$0xff]
    %v82 = vld [vmem:[#allocation5 + $0x58] sm:$0xff]
    %v83 = vld [vmem:[#allocation5 + $0x60] sm:$0xff]
    %v84 = vld [vmem:[#allocation5 + $0x68] sm:$0xff]
    %v85 = vld [vmem:[#allocation5 + $0x70] sm:$0xff]
    %v86 = vld [vmem:[#allocation5 + $0x78] sm:$0xff]
    %v87 = vld [vmem:[#allocation5 + $0x80] sm:$0xff]
    %v88 = vld [vmem:[#allocation5 + $0x88] sm:$0xff]
    %v89 = vld [vmem:[#allocation5 + $0x90] sm:$0xff]
    %v90 = vld [vmem:[#allocation5 + $0x98] sm:$0xff]
    %v91 = vld [vmem:[#allocation5 + $0xa0] sm:$0xff]
    %v92 = vld [vmem:[#allocation5 + $0xa8] sm:$0xff]
    %v93 = vld [vmem:[#allocation5 + $0xb0] sm:$0xff]
    %v94 = vld [vmem:[#allocation5 + $0xb8] sm:$0xff]
    %v95 = vld [vmem:[#allocation5 + $0xc0] sm:$0xff]
    %v96 = vld [vmem:[#allocation5 + $0xc8] sm:$0xff]
    %v97 = vld [vmem:[#allocation5 + $0xd0] sm:$0xff]
    %v98 = vld [vmem:[#allocation5 + $0xd8] sm:$0xff]
    %v99 = vld [vmem:[#allocation5 + $0xe0] sm:$0xff]
    %v100 = vld [vmem:[#allocation5 + $0xe8] sm:$0xff]
    %v101 = vld [vmem:[#allocation5 + $0xf0] sm:$0xff]
    %v102 = vld [vmem:[#allocation5 + $0xf8] sm:$0xff]
    %v103 = vld [vmem:[#allocation5 + $0x100] sm:$0xff]
    %v104 = vld [vmem:[#allocation5 + $0x108] sm:$0xff]
    %v105 = vld [vmem:[#allocation5 + $0x110] sm:$0xff]
    %v106 = vld [vmem:[#allocation5 + $0x118] sm:$0xff]
    %v107 = vld [vmem:[#allocation5 + $0x120] sm:$0xff]
    %v108 = vld [vmem:[#allocation5 + $0x128] sm:$0xff]
    %v109 = vld [vmem:[#allocation5 + $0x130] sm:$0xff]
    %v110 = vld [vmem:[#allocation5 + $0x138] sm:$0xff]
    %v111 = vld [vmem:[#allocation5 + $0x140] sm:$0xff]
    %v112 = vld [vmem:[#allocation5 + $0x148] sm:$0xff]
    %v113 = vld [vmem:[#allocation5 + $0x150] sm:$0xff]
    %v114 = vld [vmem:[#allocation5 + $0x158] sm:$0xff]
    %v115 = vld [vmem:[#allocation5 + $0x160] sm:$0xff]
    %v116 = vld [vmem:[#allocation5 + $0x168] sm:$0xff]
    %v117 = vld [vmem:[#allocation5 + $0x170] sm:$0xff]
    %v118 = vld [vmem:[#allocation5 + $0x178] sm:$0xff]
    %v119 = vld [vmem:[#allocation5 + $0x180] sm:$0xff]
    %v120 = vld [vmem:[#allocation5 + $0x188] sm:$0xff]
    %v121 = vld [vmem:[#allocation5 + $0x190] sm:$0xff]
    %v122 = vld [vmem:[#allocation5 + $0x198] sm:$0xff]
    %v123 = vld [vmem:[#allocation5 + $0x1a0] sm:$0xff]
    %v124 = vld [vmem:[#allocation5 + $0x1a8] sm:$0xff]
    %v125 = vld [vmem:[#allocation5 + $0x1b0] sm:$0xff]
    %v126 = vld [vmem:[#allocation5 + $0x1b8] sm:$0xff]
    %v127 = vld [vmem:[#allocation5 + $0x1c0] sm:$0xff]
    %v128 = vld [vmem:[#allocation5 + $0x1c8] sm:$0xff]
    %v129 = vld [vmem:[#allocation5 + $0x1d0] sm:$0xff]
    %v130 = vld [vmem:[#allocation5 + $0x1d8] sm:$0xff]
    %v131 = vld [vmem:[#allocation5 + $0x1e0] sm:$0xff]
    %v132 = vld [vmem:[#allocation5 + $0x1e8] sm:$0xff]
    %v133 = vld [vmem:[#allocation5 + $0x1f0] sm:$0xff]
    %v134 = vld [vmem:[#allocation5 + $0x1f8] sm:$0xff]
    %v135 = vld [vmem:[#allocation5 + $0x200] sm:$0xff]
    %v136 = vld [vmem:[#allocation5 + $0x208] sm:$0xff]
    %v137 = vld [vmem:[#allocation5 + $0x210] sm:$0xff]
    %v138 = vld [vmem:[#allocation5 + $0x218] sm:$0xff]
    %v139 = vld [vmem:[#allocation5 + $0x220] sm:$0xff]
    %v140 = vld [vmem:[#allocation5 + $0x228] sm:$0xff]
    %v141 = vld [vmem:[#allocation5 + $0x230] sm:$0xff]
    %v142 = vld [vmem:[#allocation5 + $0x238] sm:$0xff]
    %v143 = vld [vmem:[#allocation5 + $0x240] sm:$0xff]
    %v144 = vld [vmem:[#allocation5 + $0x248] sm:$0xff]
    %v145 = vld [vmem:[#allocation5 + $0x250] sm:$0xff]
    %v146 = vld [vmem:[#allocation5 + $0x258] sm:$0xff]
    %v147 = vld [vmem:[#allocation5 + $0x260] sm:$0xff]
    %v148 = vld [vmem:[#allocation5 + $0x268] sm:$0xff]
    %v149 = vld [vmem:[#allocation5 + $0x270] sm:$0xff]
    %v150 = vld [vmem:[#allocation5 + $0x278] sm:$0xff]
    %v151 = vld [vmem:[#allocation5 + $0x280] sm:$0xff]
    %v152 = vld [vmem:[#allocation5 + $0x288] sm:$0xff]
    %v153 = vld [vmem:[#allocation5 + $0x290] sm:$0xff]
    %v154 = vld [vmem:[#allocation5 + $0x298] sm:$0xff]
    %v155 = vld [vmem:[#allocation5 + $0x2a0] sm:$0xff]
    %v156 = vld [vmem:[#allocation5 + $0x2a8] sm:$0xff]
    %v157 = vld [vmem:[#allocation5 + $0x2b0] sm:$0xff]
    %v158 = vld [vmem:[#allocation5 + $0x2b8] sm:$0xff]
    %v159 = vld [vmem:[#allocation5 + $0x2c0] sm:$0xff]
    %v160 = vld [vmem:[#allocation5 + $0x2c8] sm:$0xff]
    %v161 = vld [vmem:[#allocation5 + $0x2d0] sm:$0xff]
    %v162 = vld [vmem:[#allocation5 + $0x2d8] sm:$0xff]
    %v163 = vld [vmem:[#allocation5 + $0x2e0] sm:$0xff]
    %v164 = vld [vmem:[#allocation5 + $0x2e8] sm:$0xff]
    %v165 = vld [vmem:[#allocation5 + $0x2f0] sm:$0xff]
    %v166 = vld [vmem:[#allocation5 + $0x2f8] sm:$0xff]
    %v167 = vld [vmem:[#allocation5 + $0x300] sm:$0xff]
    %v168 = vld [vmem:[#allocation5 + $0x308] sm:$0xff]
    %v169 = vld [vmem:[#allocation5 + $0x310] sm:$0xff]
    %v170 = vld [vmem:[#allocation5 + $0x318] sm:$0xff]
    %v171 = vld [vmem:[#allocation5 + $0x320] sm:$0xff]
    %v172 = vld [vmem:[#allocation5 + $0x328] sm:$0xff]
    %v173 = vld [vmem:[#allocation5 + $0x330] sm:$0xff]
    %v174 = vld [vmem:[#allocation5 + $0x338] sm:$0xff]
    %v175 = vld [vmem:[#allocation5 + $0x340] sm:$0xff]
    %v176 = vld [vmem:[#allocation5 + $0x348] sm:$0xff]
    %v177 = vld [vmem:[#allocation5 + $0x350] sm:$0xff]
    %v178 = vld [vmem:[#allocation5 + $0x358] sm:$0xff]
    %v179 = vld [vmem:[#allocation5 + $0x360] sm:$0xff]
    %v180 = vld [vmem:[#allocation5 + $0x368] sm:$0xff]
    %v181 = vld [vmem:[#allocation5 + $0x370] sm:$0xff]
    %v182 = vld [vmem:[#allocation5 + $0x378] sm:$0xff]
    %v183 = vld [vmem:[#allocation5 + $0x380] sm:$0xff]
    %v184 = vld [vmem:[#allocation5 + $0x388] sm:$0xff]
    %v185 = vld [vmem:[#allocation5 + $0x390] sm:$0xff]
    %v186 = vld [vmem:[#allocation5 + $0x398] sm:$0xff]
    %v187 = vld [vmem:[#allocation5 + $0x3a0] sm:$0xff]
    %v188 = vld [vmem:[#allocation5 + $0x3a8] sm:$0xff]
    %v189 = vld [vmem:[#allocation5 + $0x3b0] sm:$0xff]
    %v190 = vld [vmem:[#allocation5 + $0x3b8] sm:$0xff]
    %v191 = vld [vmem:[#allocation5 + $0x3c0] sm:$0xff]
    %v192 = vld [vmem:[#allocation5 + $0x3c8] sm:$0xff]
    %v193 = vld [vmem:[#allocation5 + $0x3d0] sm:$0xff]
    %v194 = vld [vmem:[#allocation5 + $0x3d8] sm:$0xff]
    %v195 = vld [vmem:[#allocation5 + $0x3e0] sm:$0xff]
    %v196 = vld [vmem:[#allocation5 + $0x3e8] sm:$0xff]
    %v197 = vld [vmem:[#allocation5 + $0x3f0] sm:$0xff]
    %v198 = vld [vmem:[#allocation5 + $0x3f8] sm:$0xff]
    %v199 = vld [vmem:[#allocation5 + $0x400] sm:$0xff]
    %v200 = vld [vmem:[#allocation5 + $0x408] sm:$0xff]
    %v201 = vld [vmem:[#allocation5 + $0x410] sm:$0xff]
    %v202 = vld [vmem:[#allocation5 + $0x418] sm:$0xff]
    %v203 = vld [vmem:[#allocation5 + $0x420] sm:$0xff]
    %v204 = vld [vmem:[#allocation5 + $0x428] sm:$0xff]
    %v205 = vld [vmem:[#allocation5 + $0x430] sm:$0xff]
    %v206 = vld [vmem:[#allocation5 + $0x438] sm:$0xff]
    %v207 = vld [vmem:[#allocation5 + $0x440] sm:$0xff]
    %v208 = vld [vmem:[#allocation5 + $0x448] sm:$0xff]
    %v209 = vld [vmem:[#allocation5 + $0x450] sm:$0xff]
    %v210 = vld [vmem:[#allocation5 + $0x458] sm:$0xff]
    %v211 = vld [vmem:[#allocation5 + $0x460] sm:$0xff]
    %v212 = vld [vmem:[#allocation5 + $0x468] sm:$0xff]
    %v213 = vld [vmem:[#allocation5 + $0x470] sm:$0xff]
    %v214 = vld [vmem:[#allocation5 + $0x478] sm:$0xff]
    %v215 = vld [vmem:[#allocation5 + $0x480] sm:$0xff]
    %v216 = vld [vmem:[#allocation5 + $0x488] sm:$0xff]
    %v217 = vld [vmem:[#allocation5 + $0x490] sm:$0xff]
    %v218 = vld [vmem:[#allocation5 + $0x498] sm:$0xff]
    %v219 = vld [vmem:[#allocation5 + $0x4a0] sm:$0xff]
    %v220 = vld [vmem:[#allocation5 + $0x4a8] sm:$0xff]
    %v221 = vld [vmem:[#allocation5 + $0x4b0] sm:$0xff]
    %v222 = vld [vmem:[#allocation5 + $0x4b8] sm:$0xff]
    %v223 = vld [vmem:[#allocation5 + $0x4c0] sm:$0xff]
    %v224 = vld [vmem:[#allocation5 + $0x4c8] sm:$0xff]
    %v225 = vld [vmem:[#allocation5 + $0x4d0] sm:$0xff]
    %v226 = vld [vmem:[#allocation5 + $0x4d8] sm:$0xff]
    %v227 = vld [vmem:[#allocation5 + $0x4e0] sm:$0xff]
    %v228 = vld [vmem:[#allocation5 + $0x4e8] sm:$0xff]
    %v229 = vld [vmem:[#allocation5 + $0x4f0] sm:$0xff]
    %v230 = vld [vmem:[#allocation5 + $0x4f8] sm:$0xff]
    %v231 = vld [vmem:[#allocation5 + $0x500] sm:$0xff]
    %v232 = vld [vmem:[#allocation5 + $0x508] sm:$0xff]
    %v233 = vld [vmem:[#allocation5 + $0x510] sm:$0xff]
    %v234 = vld [vmem:[#allocation5 + $0x518] sm:$0xff]
    %v235 = vld [vmem:[#allocation5 + $0x520] sm:$0xff]
    %v236 = vld [vmem:[#allocation5 + $0x528] sm:$0xff]
    %v237 = vld [vmem:[#allocation5 + $0x530] sm:$0xff]
    %v238 = vld [vmem:[#allocation5 + $0x538] sm:$0xff]
    %v239 = vld [vmem:[#allocation5 + $0x540] sm:$0xff]
    %v240 = vld [vmem:[#allocation5 + $0x548] sm:$0xff]
    %v241 = vld [vmem:[#allocation5 + $0x550] sm:$0xff]
    %v242 = vld [vmem:[#allocation5 + $0x558] sm:$0xff]
    %v243 = vld [vmem:[#allocation5 + $0x560] sm:$0xff]
    %v244 = vld [vmem:[#allocation5 + $0x568] sm:$0xff]
    %v245 = vld [vmem:[#allocation5 + $0x570] sm:$0xff]
    %v246 = vld [vmem:[#allocation5 + $0x578] sm:$0xff]
    %v247 = vld [vmem:[#allocation5 + $0x580] sm:$0xff]
    %v248 = vld [vmem:[#allocation5 + $0x588] sm:$0xff]
    %v249 = vld [vmem:[#allocation5 + $0x590] sm:$0xff]
    %v250 = vld [vmem:[#allocation5 + $0x598] sm:$0xff]
    %v251 = vld [vmem:[#allocation5 + $0x5a0] sm:$0xff]
    %v252 = vld [vmem:[#allocation5 + $0x5a8] sm:$0xff]
    %v253 = vld [vmem:[#allocation5 + $0x5b0] sm:$0xff]
    %v254 = vld [vmem:[#allocation5 + $0x5b8] sm:$0xff]
    %v255 = vld [vmem:[#allocation5 + $0x5c0] sm:$0xff]
    %v256 = vld [vmem:[#allocation5 + $0x5c8] sm:$0xff]
    %v257 = vld [vmem:[#allocation5 + $0x5d0] sm:$0xff]
    %v258 = vld [vmem:[#allocation5 + $0x5d8] sm:$0xff]
    %v259 = vld [vmem:[#allocation5 + $0x5e0] sm:$0xff]
    %v260 = vld [vmem:[#allocation5 + $0x5e8] sm:$0xff]
    %v261 = vld [vmem:[#allocation5 + $0x5f0] sm:$0xff]
    %v262 = vld [vmem:[#allocation5 + $0x5f8] sm:$0xff]
    %v263 = vld [vmem:[#allocation5 + $0x600] sm:$0xff]
    %v264 = vld [vmem:[#allocation5 + $0x608] sm:$0xff]
    %v265 = vld [vmem:[#allocation5 + $0x610] sm:$0xff]
    %v266 = vld [vmem:[#allocation5 + $0x618] sm:$0xff]
    %v267 = vunpack.c.l.bf16 %v71
    %v268 = vunpack.c.h.bf16 %v71
    %v269 = vunpack.c.l.bf16 %v72
    %v270 = vunpack.c.h.bf16 %v72
    %v271 = vunpack.c.l.bf16 %v73
    %v272 = vunpack.c.h.bf16 %v73
    %v273 = vunpack.c.l.bf16 %v74
    %v274 = vunpack.c.h.bf16 %v74
    %v275 = vunpack.c.l.bf16 %v75
    %v276 = vunpack.c.h.bf16 %v75
    %v277 = vunpack.c.l.bf16 %v76
    %v278 = vunpack.c.h.bf16 %v76
    %v279 = vunpack.c.l.bf16 %v77
    %v280 = vunpack.c.h.bf16 %v77
    %v281 = vunpack.c.l.bf16 %v78
    %v282 = vunpack.c.h.bf16 %v78
    %v283 = vunpack.c.l.bf16 %v79
    %v284 = vunpack.c.h.bf16 %v79
    %v285 = vunpack.c.l.bf16 %v80
    %v286 = vunpack.c.h.bf16 %v80
    %v287 = vunpack.c.l.bf16 %v81
    %v288 = vunpack.c.h.bf16 %v81
    %v289 = vunpack.c.l.bf16 %v82
    %v290 = vunpack.c.h.bf16 %v82
    %v291 = vunpack.c.l.bf16 %v83
    %v292 = vunpack.c.h.bf16 %v83
    %v293 = vunpack.c.l.bf16 %v84
    %v294 = vunpack.c.h.bf16 %v84
    %v295 = vunpack.c.l.bf16 %v85
    %v296 = vunpack.c.h.bf16 %v85
    %v297 = vunpack.c.l.bf16 %v86
    %v298 = vunpack.c.h.bf16 %v86
    %v299 = vunpack.c.l.bf16 %v87
    %v300 = vunpack.c.h.bf16 %v87
    %v301 = vunpack.c.l.bf16 %v88
    %v302 = vunpack.c.h.bf16 %v88
    %v303 = vunpack.c.l.bf16 %v89
    %v304 = vunpack.c.h.bf16 %v89
    %v305 = vunpack.c.l.bf16 %v90
    %v306 = vunpack.c.h.bf16 %v90
    %v307 = vunpack.c.l.bf16 %v91
    %v308 = vunpack.c.h.bf16 %v91
    %v309 = vunpack.c.l.bf16 %v92
    %v310 = vunpack.c.h.bf16 %v92
    %v311 = vunpack.c.l.bf16 %v93
    %v312 = vunpack.c.h.bf16 %v93
    %v313 = vunpack.c.l.bf16 %v94
    %v314 = vunpack.c.h.bf16 %v94
    %v315 = vunpack.c.l.bf16 %v95
    %v316 = vunpack.c.h.bf16 %v95
    %v317 = vunpack.c.l.bf16 %v96
    %v318 = vunpack.c.h.bf16 %v96
    %v319 = vunpack.c.l.bf16 %v97
    %v320 = vunpack.c.h.bf16 %v97
    %v321 = vunpack.c.l.bf16 %v98
    %v322 = vunpack.c.h.bf16 %v98
    %v323 = vunpack.c.l.bf16 %v99
    %v324 = vunpack.c.h.bf16 %v99
    %v325 = vunpack.c.l.bf16 %v100
    %v326 = vunpack.c.h.bf16 %v100
    %v327 = vunpack.c.l.bf16 %v101
    %v328 = vunpack.c.h.bf16 %v101
    %v329 = vunpack.c.l.bf16 %v102
    %v330 = vunpack.c.h.bf16 %v102
    %v331 = vunpack.c.l.bf16 %v103
    %v332 = vunpack.c.h.bf16 %v103
    %v333 = vunpack.c.l.bf16 %v104
    %v334 = vunpack.c.h.bf16 %v104
    %v335 = vunpack.c.l.bf16 %v105
    %v336 = vunpack.c.h.bf16 %v105
    %v337 = vunpack.c.l.bf16 %v106
    %v338 = vunpack.c.h.bf16 %v106
    %v339 = vunpack.c.l.bf16 %v107
    %v340 = vunpack.c.h.bf16 %v107
    %v341 = vunpack.c.l.bf16 %v108
    %v342 = vunpack.c.h.bf16 %v108
    %v343 = vunpack.c.l.bf16 %v109
    %v344 = vunpack.c.h.bf16 %v109
    %v345 = vunpack.c.l.bf16 %v110
    %v346 = vunpack.c.h.bf16 %v110
    %v347 = vunpack.c.l.bf16 %v111
    %v348 = vunpack.c.h.bf16 %v111
    %v349 = vunpack.c.l.bf16 %v112
    %v350 = vunpack.c.h.bf16 %v112
    %v351 = vunpack.c.l.bf16 %v113
    %v352 = vunpack.c.h.bf16 %v113
    %v353 = vunpack.c.l.bf16 %v114
    %v354 = vunpack.c.h.bf16 %v114
    %v355 = vunpack.c.l.bf16 %v115
    %v356 = vunpack.c.h.bf16 %v115
    %v357 = vunpack.c.l.bf16 %v116
    %v358 = vunpack.c.h.bf16 %v116
    %v359 = vunpack.c.l.bf16 %v117
    %v360 = vunpack.c.h.bf16 %v117
    %v361 = vunpack.c.l.bf16 %v118
    %v362 = vunpack.c.h.bf16 %v118
    %v363 = vunpack.c.l.bf16 %v119
    %v364 = vunpack.c.h.bf16 %v119
    %v365 = vunpack.c.l.bf16 %v120
    %v366 = vunpack.c.h.bf16 %v120
    %v367 = vunpack.c.l.bf16 %v121
    %v368 = vunpack.c.h.bf16 %v121
    %v369 = vunpack.c.l.bf16 %v122
    %v370 = vunpack.c.h.bf16 %v122
    %v371 = vunpack.c.l.bf16 %v123
    %v372 = vunpack.c.h.bf16 %v123
    %v373 = vunpack.c.l.bf16 %v124
    %v374 = vunpack.c.h.bf16 %v124
    %v375 = vunpack.c.l.bf16 %v125
    %v376 = vunpack.c.h.bf16 %v125
    %v377 = vunpack.c.l.bf16 %v126
    %v378 = vunpack.c.h.bf16 %v126
    %v379 = vunpack.c.l.bf16 %v127
    %v380 = vunpack.c.h.bf16 %v127
    %v381 = vunpack.c.l.bf16 %v128
    %v382 = vunpack.c.h.bf16 %v128
    %v383 = vunpack.c.l.bf16 %v129
    %v384 = vunpack.c.h.bf16 %v129
    %v385 = vunpack.c.l.bf16 %v130
    %v386 = vunpack.c.h.bf16 %v130
    %v387 = vunpack.c.l.bf16 %v131
    %v388 = vunpack.c.h.bf16 %v131
    %v389 = vunpack.c.l.bf16 %v132
    %v390 = vunpack.c.h.bf16 %v132
    %v391 = vunpack.c.l.bf16 %v133
    %v392 = vunpack.c.h.bf16 %v133
    %v393 = vunpack.c.l.bf16 %v134
    %v394 = vunpack.c.h.bf16 %v134
    %v395 = vunpack.c.l.bf16 %v135
    %v396 = vunpack.c.h.bf16 %v135
    %v397 = vunpack.c.l.bf16 %v136
    %v398 = vunpack.c.h.bf16 %v136
    %v399 = vunpack.c.l.bf16 %v137
    %v400 = vunpack.c.h.bf16 %v137
    %v401 = vunpack.c.l.bf16 %v138
    %v402 = vunpack.c.h.bf16 %v138
    %v403 = vunpack.c.l.bf16 %v139
    %v404 = vunpack.c.h.bf16 %v139
    %v405 = vunpack.c.l.bf16 %v140
    %v406 = vunpack.c.h.bf16 %v140
    %v407 = vunpack.c.l.bf16 %v141
    %v408 = vunpack.c.h.bf16 %v141
    %v409 = vunpack.c.l.bf16 %v142
    %v410 = vunpack.c.h.bf16 %v142
    %v411 = vunpack.c.l.bf16 %v143
    %v412 = vunpack.c.h.bf16 %v143
    %v413 = vunpack.c.l.bf16 %v144
    %v414 = vunpack.c.h.bf16 %v144
    %v415 = vunpack.c.l.bf16 %v145
    %v416 = vunpack.c.h.bf16 %v145
    %v417 = vunpack.c.l.bf16 %v146
    %v418 = vunpack.c.h.bf16 %v146
    %v419 = vunpack.c.l.bf16 %v147
    %v420 = vunpack.c.h.bf16 %v147
    %v421 = vunpack.c.l.bf16 %v148
    %v422 = vunpack.c.h.bf16 %v148
    %v423 = vunpack.c.l.bf16 %v149
    %v424 = vunpack.c.h.bf16 %v149
    %v425 = vunpack.c.l.bf16 %v150
    %v426 = vunpack.c.h.bf16 %v150
    %v427 = vunpack.c.l.bf16 %v151
    %v428 = vunpack.c.h.bf16 %v151
    %v429 = vunpack.c.l.bf16 %v152
    %v430 = vunpack.c.h.bf16 %v152
    %v431 = vunpack.c.l.bf16 %v153
    %v432 = vunpack.c.h.bf16 %v153
    %v433 = vunpack.c.l.bf16 %v154
    %v434 = vunpack.c.h.bf16 %v154
    %v435 = vunpack.c.l.bf16 %v155
    %v436 = vunpack.c.h.bf16 %v155
    %v437 = vunpack.c.l.bf16 %v156
    %v438 = vunpack.c.h.bf16 %v156
    %v439 = vunpack.c.l.bf16 %v157
    %v440 = vunpack.c.h.bf16 %v157
    %v441 = vunpack.c.l.bf16 %v158
    %v442 = vunpack.c.h.bf16 %v158
    %v443 = vunpack.c.l.bf16 %v159
    %v444 = vunpack.c.h.bf16 %v159
    %v445 = vunpack.c.l.bf16 %v160
    %v446 = vunpack.c.h.bf16 %v160
    %v447 = vunpack.c.l.bf16 %v161
    %v448 = vunpack.c.h.bf16 %v161
    %v449 = vunpack.c.l.bf16 %v162
    %v450 = vunpack.c.h.bf16 %v162
    %v451 = vunpack.c.l.bf16 %v163
    %v452 = vunpack.c.h.bf16 %v163
    %v453 = vunpack.c.l.bf16 %v164
    %v454 = vunpack.c.h.bf16 %v164
    %v455 = vunpack.c.l.bf16 %v165
    %v456 = vunpack.c.h.bf16 %v165
    %v457 = vunpack.c.l.bf16 %v166
    %v458 = vunpack.c.h.bf16 %v166
    %v459 = vunpack.c.l.bf16 %v167
    %v460 = vunpack.c.h.bf16 %v167
    %v461 = vunpack.c.l.bf16 %v168
    %v462 = vunpack.c.h.bf16 %v168
    %v463 = vunpack.c.l.bf16 %v169
    %v464 = vunpack.c.h.bf16 %v169
    %v465 = vunpack.c.l.bf16 %v170
    %v466 = vunpack.c.h.bf16 %v170
    %v467 = vunpack.c.l.bf16 %v171
    %v468 = vunpack.c.h.bf16 %v171
    %v469 = vunpack.c.l.bf16 %v172
    %v470 = vunpack.c.h.bf16 %v172
    %v471 = vunpack.c.l.bf16 %v173
    %v472 = vunpack.c.h.bf16 %v173
    %v473 = vunpack.c.l.bf16 %v174
    %v474 = vunpack.c.h.bf16 %v174
    %v475 = vunpack.c.l.bf16 %v175
    %v476 = vunpack.c.h.bf16 %v175
    %v477 = vunpack.c.l.bf16 %v176
    %v478 = vunpack.c.h.bf16 %v176
    %v479 = vunpack.c.l.bf16 %v177
    %v480 = vunpack.c.h.bf16 %v177
    %v481 = vunpack.c.l.bf16 %v178
    %v482 = vunpack.c.h.bf16 %v178
    %v483 = vunpack.c.l.bf16 %v179
    %v484 = vunpack.c.h.bf16 %v179
    %v485 = vunpack.c.l.bf16 %v180
    %v486 = vunpack.c.h.bf16 %v180
    %v487 = vunpack.c.l.bf16 %v181
    %v488 = vunpack.c.h.bf16 %v181
    %v489 = vunpack.c.l.bf16 %v182
    %v490 = vunpack.c.h.bf16 %v182
    %v491 = vunpack.c.l.bf16 %v183
    %v492 = vunpack.c.h.bf16 %v183
    %v493 = vunpack.c.l.bf16 %v184
    %v494 = vunpack.c.h.bf16 %v184
    %v495 = vunpack.c.l.bf16 %v185
    %v496 = vunpack.c.h.bf16 %v185
    %v497 = vunpack.c.l.bf16 %v186
    %v498 = vunpack.c.h.bf16 %v186
    %v499 = vunpack.c.l.bf16 %v187
    %v500 = vunpack.c.h.bf16 %v187
    %v501 = vunpack.c.l.bf16 %v188
    %v502 = vunpack.c.h.bf16 %v188
    %v503 = vunpack.c.l.bf16 %v189
    %v504 = vunpack.c.h.bf16 %v189
    %v505 = vunpack.c.l.bf16 %v190
    %v506 = vunpack.c.h.bf16 %v190
    %v507 = vunpack.c.l.bf16 %v191
    %v508 = vunpack.c.h.bf16 %v191
    %v509 = vunpack.c.l.bf16 %v192
    %v510 = vunpack.c.h.bf16 %v192
    %v511 = vunpack.c.l.bf16 %v193
    %v512 = vunpack.c.h.bf16 %v193
    %v513 = vunpack.c.l.bf16 %v194
    %v514 = vunpack.c.h.bf16 %v194
    %v515 = vunpack.c.l.bf16 %v195
    %v516 = vunpack.c.h.bf16 %v195
    %v517 = vunpack.c.l.bf16 %v196
    %v518 = vunpack.c.h.bf16 %v196
    %v519 = vunpack.c.l.bf16 %v197
    %v520 = vunpack.c.h.bf16 %v197
    %v521 = vunpack.c.l.bf16 %v198
    %v522 = vunpack.c.h.bf16 %v198
    %v523 = vunpack.c.l.bf16 %v199
    %v524 = vunpack.c.h.bf16 %v199
    %v525 = vunpack.c.l.bf16 %v200
    %v526 = vunpack.c.h.bf16 %v200
    %v527 = vunpack.c.l.bf16 %v201
    %v528 = vunpack.c.h.bf16 %v201
    %v529 = vunpack.c.l.bf16 %v202
    %v530 = vunpack.c.h.bf16 %v202
    %v531 = vunpack.c.l.bf16 %v203
    %v532 = vunpack.c.h.bf16 %v203
    %v533 = vunpack.c.l.bf16 %v204
    %v534 = vunpack.c.h.bf16 %v204
    %v535 = vunpack.c.l.bf16 %v205
    %v536 = vunpack.c.h.bf16 %v205
    %v537 = vunpack.c.l.bf16 %v206
    %v538 = vunpack.c.h.bf16 %v206
    %v539 = vunpack.c.l.bf16 %v207
    %v540 = vunpack.c.h.bf16 %v207
    %v541 = vunpack.c.l.bf16 %v208
    %v542 = vunpack.c.h.bf16 %v208
    %v543 = vunpack.c.l.bf16 %v209
    %v544 = vunpack.c.h.bf16 %v209
    %v545 = vunpack.c.l.bf16 %v210
    %v546 = vunpack.c.h.bf16 %v210
    %v547 = vunpack.c.l.bf16 %v211
    %v548 = vunpack.c.h.bf16 %v211
    %v549 = vunpack.c.l.bf16 %v212
    %v550 = vunpack.c.h.bf16 %v212
    %v551 = vunpack.c.l.bf16 %v213
    %v552 = vunpack.c.h.bf16 %v213
    %v553 = vunpack.c.l.bf16 %v214
    %v554 = vunpack.c.h.bf16 %v214
    %v555 = vunpack.c.l.bf16 %v215
    %v556 = vunpack.c.h.bf16 %v215
    %v557 = vunpack.c.l.bf16 %v216
    %v558 = vunpack.c.h.bf16 %v216
    %v559 = vunpack.c.l.bf16 %v217
    %v560 = vunpack.c.h.bf16 %v217
    %v561 = vunpack.c.l.bf16 %v218
    %v562 = vunpack.c.h.bf16 %v218
    %v563 = vunpack.c.l.bf16 %v219
    %v564 = vunpack.c.h.bf16 %v219
    %v565 = vunpack.c.l.bf16 %v220
    %v566 = vunpack.c.h.bf16 %v220
    %v567 = vunpack.c.l.bf16 %v221
    %v568 = vunpack.c.h.bf16 %v221
    %v569 = vunpack.c.l.bf16 %v222
    %v570 = vunpack.c.h.bf16 %v222
    %v571 = vunpack.c.l.bf16 %v223
    %v572 = vunpack.c.h.bf16 %v223
    %v573 = vunpack.c.l.bf16 %v224
    %v574 = vunpack.c.h.bf16 %v224
    %v575 = vunpack.c.l.bf16 %v225
    %v576 = vunpack.c.h.bf16 %v225
    %v577 = vunpack.c.l.bf16 %v226
    %v578 = vunpack.c.h.bf16 %v226
    %v579 = vunpack.c.l.bf16 %v227
    %v580 = vunpack.c.h.bf16 %v227
    %v581 = vunpack.c.l.bf16 %v228
    %v582 = vunpack.c.h.bf16 %v228
    %v583 = vunpack.c.l.bf16 %v229
    %v584 = vunpack.c.h.bf16 %v229
    %v585 = vunpack.c.l.bf16 %v230
    %v586 = vunpack.c.h.bf16 %v230
    %v587 = vunpack.c.l.bf16 %v231
    %v588 = vunpack.c.h.bf16 %v231
    %v589 = vunpack.c.l.bf16 %v232
    %v590 = vunpack.c.h.bf16 %v232
    %v591 = vunpack.c.l.bf16 %v233
    %v592 = vunpack.c.h.bf16 %v233
    %v593 = vunpack.c.l.bf16 %v234
    %v594 = vunpack.c.h.bf16 %v234
    %v595 = vunpack.c.l.bf16 %v235
    %v596 = vunpack.c.h.bf16 %v235
    %v597 = vunpack.c.l.bf16 %v236
    %v598 = vunpack.c.h.bf16 %v236
    %v599 = vunpack.c.l.bf16 %v237
    %v600 = vunpack.c.h.bf16 %v237
    %v601 = vunpack.c.l.bf16 %v238
    %v602 = vunpack.c.h.bf16 %v238
    %v603 = vunpack.c.l.bf16 %v239
    %v604 = vunpack.c.h.bf16 %v239
    %v605 = vunpack.c.l.bf16 %v240
    %v606 = vunpack.c.h.bf16 %v240
    %v607 = vunpack.c.l.bf16 %v241
    %v608 = vunpack.c.h.bf16 %v241
    %v609 = vunpack.c.l.bf16 %v242
    %v610 = vunpack.c.h.bf16 %v242
    %v611 = vunpack.c.l.bf16 %v243
    %v612 = vunpack.c.h.bf16 %v243
    %v613 = vunpack.c.l.bf16 %v244
    %v614 = vunpack.c.h.bf16 %v244
    %v615 = vunpack.c.l.bf16 %v245
    %v616 = vunpack.c.h.bf16 %v245
    %v617 = vunpack.c.l.bf16 %v246
    %v618 = vunpack.c.h.bf16 %v246
    %v619 = vunpack.c.l.bf16 %v247
    %v620 = vunpack.c.h.bf16 %v247
    %v621 = vunpack.c.l.bf16 %v248
    %v622 = vunpack.c.h.bf16 %v248
    %v623 = vunpack.c.l.bf16 %v249
    %v624 = vunpack.c.h.bf16 %v249
    %v625 = vunpack.c.l.bf16 %v250
    %v626 = vunpack.c.h.bf16 %v250
    %v627 = vunpack.c.l.bf16 %v251
    %v628 = vunpack.c.h.bf16 %v251
    %v629 = vunpack.c.l.bf16 %v252
    %v630 = vunpack.c.h.bf16 %v252
    %v631 = vunpack.c.l.bf16 %v253
    %v632 = vunpack.c.h.bf16 %v253
    %v633 = vunpack.c.l.bf16 %v254
    %v634 = vunpack.c.h.bf16 %v254
    %v635 = vunpack.c.l.bf16 %v255
    %v636 = vunpack.c.h.bf16 %v255
    %v637 = vunpack.c.l.bf16 %v256
    %v638 = vunpack.c.h.bf16 %v256
    %v639 = vunpack.c.l.bf16 %v257
    %v640 = vunpack.c.h.bf16 %v257
    %v641 = vunpack.c.l.bf16 %v258
    %v642 = vunpack.c.h.bf16 %v258
    %v643 = vunpack.c.l.bf16 %v259
    %v644 = vunpack.c.h.bf16 %v259
    %v645 = vunpack.c.l.bf16 %v260
    %v646 = vunpack.c.h.bf16 %v260
    %v647 = vunpack.c.l.bf16 %v261
    %v648 = vunpack.c.h.bf16 %v261
    %v649 = vunpack.c.l.bf16 %v262
    %v650 = vunpack.c.h.bf16 %v262
    %v651 = vunpack.c.l.bf16 %v263
    %v652 = vunpack.c.h.bf16 %v263
    %v653 = vunpack.c.l.bf16 %v264
    %v654 = vunpack.c.h.bf16 %v264
    %v655 = vunpack.c.l.bf16 %v265
    %v656 = vunpack.c.h.bf16 %v265
    %v657 = vunpack.c.l.bf16 %v266
    %v658 = vunpack.c.h.bf16 %v266
    %v659 = vld [vmem:[#allocation8] ss:$8 sm:$0xf]
    %v661 = vlaneseq
    %v662 = vshrl.u32 %v661, 7
    %v663 = vsub.s32 0, %v662
    %v664 = vrot.slane %v659, %v663
    %v665 = vlaneseq
    %v666 = vshrl.u32 %v665, 7
    %v667 = vsub.s32 1, %v666
    %v668 = vrot.slane %v659, %v667
    %v669 = vlaneseq
    %v670 = vshrl.u32 %v669, 7
    %v671 = vsub.s32 2, %v670
    %v672 = vrot.slane %v659, %v671
    %v673 = vlaneseq
    %v674 = vshrl.u32 %v673, 7
    %v675 = vsub.s32 3, %v674
    %v676 = vrot.slane %v659, %v675
    %v683 = vcombine.high %v69, %v69
    %v685 = vunpack.c.l.s4 1983009808
    %v686 = vunpack.c.0.s8 %v685
    %v687 = vlaneseq
    %v688 = vshrl.u32 %v687, 7
    %v689 = vsub.s32 %v686, %v688
    %v690 = vrot.slane %v69, %v689
    %v692 = vunpack.c.l.s4 1983009808
    %v693 = vunpack.c.0.s8 %v692
    %v694 = vlaneseq
    %v695 = vshrl.u32 %v694, 7
    %v696 = vsub.s32 %v693, %v695
    %v697 = vrot.slane %v683, %v696
    %v698 = vcombine.high %v690, %v690
    %v699 = vcombine.high %v697, %v697
    %v700 = vcombine.high %v70, %v70
    %v702 = vunpack.c.l.s4 1983009808
    %v703 = vunpack.c.0.s8 %v702
    %v704 = vlaneseq
    %v705 = vshrl.u32 %v704, 7
    %v706 = vsub.s32 %v703, %v705
    %v707 = vrot.slane %v70, %v706
    %v709 = vunpack.c.l.s4 1983009808
    %v710 = vunpack.c.0.s8 %v709
    %v711 = vlaneseq
    %v712 = vshrl.u32 %v711, 7
    %v713 = vsub.s32 %v710, %v712
    %v714 = vrot.slane %v700, %v713
    %v715 = vcombine.high %v707, %v707
    %vm722 = vcmask 130048
    %v723 = vsel %vm722, %v714, 0
    %725 = vmatprep.subr.mxu0 %v268
    %726 = vmatpush1.msra.mxu0 %v267
    %727 = vmatprep.subr.mxu0 %v272
    %728 = vmatpush1.msra.mxu0 %v271
    %729 = vmatprep.subr.mxu0 %v276
    %730 = vmatpush1.msra.mxu0 %v275
    %731 = vmatprep.subr.mxu0 %v280
    %732 = vmatpush1.msra.mxu0 %v279
    %733 = vmatprep.subr.mxu0 %v284
    %734 = vmatpush1.msra.mxu0 %v283
    %735 = vmatprep.subr.mxu0 %v288
    %736 = vmatpush1.msra.mxu0 %v287
    %737 = vmatprep.subr.mxu0 %v292
    %738 = vmatpush1.msra.mxu0 %v291
    %739 = vmatprep.subr.mxu0 %v296
    %740 = vmatpush1.msra.mxu0 %v295
    %741 = vmatprep.subr.mxu0 %v300
    %742 = vmatpush1.msra.mxu0 %v299
    %743 = vmatprep.subr.mxu0 %v304
    %744 = vmatpush1.msra.mxu0 %v303
    %745 = vmatprep.subr.mxu0 %v308
    %746 = vmatpush1.msra.mxu0 %v307
    %747 = vmatprep.subr.mxu0 %v312
    %748 = vmatpush1.msra.mxu0 %v311
    %749 = vmatprep.subr.mxu0 %v316
    %750 = vmatpush1.msra.mxu0 %v315
    %751 = vmatprep.subr.mxu0 %v320
    %752 = vmatpush1.msra.mxu0 %v319
    %753 = vmatprep.subr.mxu0 %v324
    %754 = vmatpush1.msra.mxu0 %v323
    %755 = vmatprep.subr.mxu0 %v328
    %756 = vmatpush1.msra.mxu0 %v327
    %757 = vmatprep.subr.mxu0 %v332
    %758 = vmatpush1.msra.mxu0 %v331
    %759 = vmatprep.subr.mxu0 %v336
    %760 = vmatpush1.msra.mxu0 %v335
    %761 = vmatprep.subr.mxu0 %v340
    %762 = vmatpush1.msra.mxu0 %v339
    %763 = vmatprep.subr.mxu0 %v344
    %764 = vmatpush1.msra.mxu0 %v343
    %765 = vmatprep.subr.mxu0 %v348
    %766 = vmatpush1.msra.mxu0 %v347
    %767 = vmatprep.subr.mxu0 %v352
    %768 = vmatpush1.msra.mxu0 %v351
    %769 = vmatprep.subr.mxu0 %v356
    %770 = vmatpush1.msra.mxu0 %v355
    %771 = vmatprep.subr.mxu0 %v360
    %772 = vmatpush1.msra.mxu0 %v359
    %773 = vmatprep.subr.mxu0 %v364
    %774 = vmatpush1.msra.mxu0 %v363
    %775 = vmatprep.subr.mxu0 %v368
    %776 = vmatpush1.msra.mxu0 %v367
    %777 = vmatprep.subr.mxu0 %v372
    %778 = vmatpush1.msra.mxu0 %v371
    %779 = vmatprep.subr.mxu0 %v376
    %780 = vmatpush1.msra.mxu0 %v375
    %781 = vmatprep.subr.mxu0 %v380
    %782 = vmatpush1.msra.mxu0 %v379
    %783 = vmatprep.subr.mxu0 %v384
    %784 = vmatpush1.msra.mxu0 %v383
    %785 = vmatprep.subr.mxu0 %v388
    %786 = vmatpush1.msra.mxu0 %v387
    %787 = vmatprep.subr.mxu0 %v392
    %788 = vmatpush1.msra.mxu0 %v391
    %789 = vmatprep.mubr.f32.mxu0 %v698
    %790 = vmatmul.mubr.f32.gmra.mrb[0].mxu0 %v690
    %v791 = vpop.f32.mrb[0].mxu0
    %v792 = vadd.f32 %v664, %v791
    %v793 = vpop.f32.mrb[0].mxu0
    %v794 = vadd.f32 %v668, %v793
    %795 = vdwg.mxu0
    %796 = vmatprep.subr.mxu0 %v396
    %797 = vmatpush1.msra.mxu0 %v395
    %798 = vmatprep.subr.mxu0 %v400
    %799 = vmatpush1.msra.mxu0 %v399
    %800 = vmatprep.subr.mxu0 %v404
    %801 = vmatpush1.msra.mxu0 %v403
    %802 = vmatprep.subr.mxu0 %v408
    %803 = vmatpush1.msra.mxu0 %v407
    %804 = vmatprep.subr.mxu0 %v412
    %805 = vmatpush1.msra.mxu0 %v411
    %806 = vmatprep.subr.mxu0 %v416
    %807 = vmatpush1.msra.mxu0 %v415
    %808 = vmatprep.subr.mxu0 %v420
    %809 = vmatpush1.msra.mxu0 %v419
    %810 = vmatprep.subr.mxu0 %v424
    %811 = vmatpush1.msra.mxu0 %v423
    %812 = vmatprep.subr.mxu0 %v428
    %813 = vmatpush1.msra.mxu0 %v427
    %814 = vmatprep.subr.mxu0 %v432
    %815 = vmatpush1.msra.mxu0 %v431
    %816 = vmatprep.subr.mxu0 %v436
    %817 = vmatpush1.msra.mxu0 %v435
    %818 = vmatprep.subr.mxu0 %v440
    %819 = vmatpush1.msra.mxu0 %v439
    %820 = vmatprep.subr.mxu0 %v444
    %821 = vmatpush1.msra.mxu0 %v443
    %822 = vmatprep.subr.mxu0 %v448
    %823 = vmatpush1.msra.mxu0 %v447
    %824 = vmatprep.subr.mxu0 %v452
    %825 = vmatpush1.msra.mxu0 %v451
    %826 = vmatprep.subr.mxu0 %v456
    %827 = vmatpush1.msra.mxu0 %v455
    %828 = vmatprep.subr.mxu0 %v460
    %829 = vmatpush1.msra.mxu0 %v459
    %830 = vmatprep.subr.mxu0 %v464
    %831 = vmatpush1.msra.mxu0 %v463
    %832 = vmatprep.subr.mxu0 %v468
    %833 = vmatpush1.msra.mxu0 %v467
    %834 = vmatprep.subr.mxu0 %v472
    %835 = vmatpush1.msra.mxu0 %v471
    %836 = vmatprep.subr.mxu0 %v476
    %837 = vmatpush1.msra.mxu0 %v475
    %838 = vmatprep.subr.mxu0 %v480
    %839 = vmatpush1.msra.mxu0 %v479
    %840 = vmatprep.subr.mxu0 %v484
    %841 = vmatpush1.msra.mxu0 %v483
    %842 = vmatprep.subr.mxu0 %v488
    %843 = vmatpush1.msra.mxu0 %v487
    %844 = vmatprep.subr.mxu0 %v492
    %845 = vmatpush1.msra.mxu0 %v491
    %846 = vmatprep.subr.mxu0 %v496
    %847 = vmatpush1.msra.mxu0 %v495
    %848 = vmatprep.subr.mxu0 %v500
    %849 = vmatpush1.msra.mxu0 %v499
    %850 = vmatprep.subr.mxu0 %v504
    %851 = vmatpush1.msra.mxu0 %v503
    %852 = vmatprep.subr.mxu0 %v508
    %853 = vmatpush1.msra.mxu0 %v507
    %854 = vmatprep.subr.mxu0 %v512
    %855 = vmatpush1.msra.mxu0 %v511
    %856 = vmatprep.subr.mxu0 %v516
    %857 = vmatpush1.msra.mxu0 %v515
    %858 = vmatprep.subr.mxu0 %v520
    %859 = vmatpush1.msra.mxu0 %v519
    %860 = vmatprep.mubr.f32.mxu0 %v699
    %861 = vmatmul.mubr.f32.gmra.mrb[0].mxu0 %v697
    %v862 = vpop.f32.mrb[0].mxu0
    %v863 = vadd.f32 %v792, %v862
    %v864 = vpop.f32.mrb[0].mxu0
    %v865 = vadd.f32 %v794, %v864
    %866 = vdwg.mxu0
    %867 = vmatprep.subr.mxu0 %v524
    %868 = vmatpush1.msra.mxu0 %v523
    %869 = vmatprep.subr.mxu0 %v528
    %870 = vmatpush1.msra.mxu0 %v527
    %871 = vmatprep.subr.mxu0 %v532
    %872 = vmatpush1.msra.mxu0 %v531
    %873 = vmatprep.subr.mxu0 %v536
    %874 = vmatpush1.msra.mxu0 %v535
    %875 = vmatprep.subr.mxu0 %v540
    %876 = vmatpush1.msra.mxu0 %v539
    %877 = vmatprep.subr.mxu0 %v544
    %878 = vmatpush1.msra.mxu0 %v543
    %879 = vmatprep.subr.mxu0 %v548
    %880 = vmatpush1.msra.mxu0 %v547
    %881 = vmatprep.subr.mxu0 %v552
    %882 = vmatpush1.msra.mxu0 %v551
    %883 = vmatprep.subr.mxu0 %v556
    %884 = vmatpush1.msra.mxu0 %v555
    %885 = vmatprep.subr.mxu0 %v560
    %886 = vmatpush1.msra.mxu0 %v559
    %887 = vmatprep.subr.mxu0 %v564
    %888 = vmatpush1.msra.mxu0 %v563
    %889 = vmatprep.subr.mxu0 %v568
    %890 = vmatpush1.msra.mxu0 %v567
    %891 = vmatprep.subr.mxu0 %v572
    %892 = vmatpush1.msra.mxu0 %v571
    %893 = vmatprep.subr.mxu0 %v576
    %894 = vmatpush1.msra.mxu0 %v575
    %895 = vmatprep.subr.mxu0 %v580
    %896 = vmatpush1.msra.mxu0 %v579
    %897 = vmatprep.subr.mxu0 %v584
    %898 = vmatpush1.msra.mxu0 %v583
    %899 = vmatprep.subr.mxu0 %v588
    %900 = vmatpush1.msra.mxu0 %v587
    %901 = vmatprep.subr.mxu0 %v592
    %902 = vmatpush1.msra.mxu0 %v591
    %903 = vmatprep.subr.mxu0 %v596
    %904 = vmatpush1.msra.mxu0 %v595
    %905 = vmatprep.subr.mxu0 %v600
    %906 = vmatpush1.msra.mxu0 %v599
    %907 = vmatprep.subr.mxu0 %v604
    %908 = vmatpush1.msra.mxu0 %v603
    %909 = vmatprep.subr.mxu0 %v608
    %910 = vmatpush1.msra.mxu0 %v607
    %911 = vmatprep.subr.mxu0 %v612
    %912 = vmatpush1.msra.mxu0 %v611
    %913 = vmatprep.subr.mxu0 %v616
    %914 = vmatpush1.msra.mxu0 %v615
    %915 = vmatprep.subr.mxu0 %v620
    %916 = vmatpush1.msra.mxu0 %v619
    %917 = vmatprep.subr.mxu0 %v624
    %918 = vmatpush1.msra.mxu0 %v623
    %919 = vmatprep.subr.mxu0 %v628
    %920 = vmatpush1.msra.mxu0 %v627
    %921 = vmatprep.subr.mxu0 %v632
    %922 = vmatpush1.msra.mxu0 %v631
    %923 = vmatprep.subr.mxu0 %v636
    %924 = vmatpush1.msra.mxu0 %v635
    %925 = vmatprep.subr.mxu0 %v640
    %926 = vmatpush1.msra.mxu0 %v639
    %927 = vmatprep.subr.mxu0 %v644
    %928 = vmatpush1.msra.mxu0 %v643
    %929 = vmatprep.subr.mxu0 %v648
    %930 = vmatpush1.msra.mxu0 %v647
    %931 = vmatprep.mubr.f32.mxu0 %v715
    %932 = vmatmul.mubr.f32.gmra.mrb[0].mxu0 %v707
    %v933 = vpop.f32.mrb[0].mxu0
    %v934 = vadd.f32 %v863, %v933
    %v935 = vpop.f32.mrb[0].mxu0
    %v936 = vadd.f32 %v865, %v935
    %937 = vdwg.mxu0
    %938 = vmatprep.subr.mxu0 %v652
    %939 = vmatpush1.msra.mxu0 %v651
    %940 = vmatprep.subr.mxu0 %v656
    %941 = vmatpush1.msra.mxu0 %v655
    %942 = vmatprep.subr.mxu0 0.0
    %943 = vmatpush1.msra.mxu0 0.0
    %944 = vmatprep.subr.mxu0 0.0
    %945 = vmatpush1.msra.mxu0 0.0
    %946 = vmatprep.subr.mxu0 0.0
    %947 = vmatpush1.msra.mxu0 0.0
    %948 = vmatprep.subr.mxu0 0.0
    %949 = vmatpush1.msra.mxu0 0.0
    %950 = vmatprep.subr.mxu0 0.0
    %951 = vmatpush1.msra.mxu0 0.0
    %952 = vmatprep.subr.mxu0 0.0
    %953 = vmatpush1.msra.mxu0 0.0
    %954 = vmatprep.subr.mxu0 0.0
    %955 = vmatpush1.msra.mxu0 0.0
    %956 = vmatprep.subr.mxu0 0.0
    %957 = vmatpush1.msra.mxu0 0.0
    %958 = vmatprep.subr.mxu0 0.0
    %959 = vmatpush1.msra.mxu0 0.0
    %960 = vmatprep.subr.mxu0 0.0
    %961 = vmatpush1.msra.mxu0 0.0
    %962 = vmatprep.subr.mxu0 0.0
    %963 = vmatpush1.msra.mxu0 0.0
    %964 = vmatprep.subr.mxu0 0.0
    %965 = vmatpush1.msra.mxu0 0.0
    %966 = vmatprep.subr.mxu0 0.0
    %967 = vmatpush1.msra.mxu0 0.0
    %968 = vmatprep.subr.mxu0 0.0
    %969 = vmatpush1.msra.mxu0 0.0
    %970 = vmatprep.subr.mxu0 0.0
    %971 = vmatpush1.msra.mxu0 0.0
    %972 = vmatprep.subr.mxu0 0.0
    %973 = vmatpush1.msra.mxu0 0.0
    %974 = vmatprep.subr.mxu0 0.0
    %975 = vmatpush1.msra.mxu0 0.0
    %976 = vmatprep.subr.mxu0 0.0
    %977 = vmatpush1.msra.mxu0 0.0
    %978 = vmatprep.subr.mxu0 0.0
    %979 = vmatpush1.msra.mxu0 0.0
    %980 = vmatprep.subr.mxu0 0.0
    %981 = vmatpush1.msra.mxu0 0.0
    %982 = vmatprep.subr.mxu0 0.0
    %983 = vmatpush1.msra.mxu0 0.0
    %984 = vmatprep.subr.mxu0 0.0
    %985 = vmatpush1.msra.mxu0 0.0
    %986 = vmatprep.subr.mxu0 0.0
    %987 = vmatpush1.msra.mxu0 0.0
    %988 = vmatprep.subr.mxu0 0.0
    %989 = vmatpush1.msra.mxu0 0.0
    %990 = vmatprep.subr.mxu0 0.0
    %991 = vmatpush1.msra.mxu0 0.0
    %992 = vmatprep.subr.mxu0 0.0
    %993 = vmatpush1.msra.mxu0 0.0
    %994 = vmatprep.subr.mxu0 0.0
    %995 = vmatpush1.msra.mxu0 0.0
    %996 = vmatprep.subr.mxu0 0.0
    %997 = vmatpush1.msra.mxu0 0.0
    %998 = vmatprep.subr.mxu0 0.0
    %999 = vmatpush1.msra.mxu0 0.0
    %1000 = vmatprep.subr.mxu0 0.0
    %1001 = vmatpush1.msra.mxu0 0.0
    %1002 = vmatprep.mubr.f32.mxu0 0.0
    %1003 = vmatmul.mubr.f32.gmra.mrb[0].mxu0 %v723
    %v1004 = vpop.f32.mrb[0].mxu0
    %v1005 = vadd.f32 %v934, %v1004
    %v1006 = vpop.f32.mrb[0].mxu0
    %v1007 = vadd.f32 %v936, %v1006
    %1008 = vdwg.mxu0
    %1009 = vmatprep.subr.mxu0 %v270
    %1010 = vmatpush1.msra.mxu0 %v269
    %1011 = vmatprep.subr.mxu0 %v274
    %1012 = vmatpush1.msra.mxu0 %v273
    %1013 = vmatprep.subr.mxu0 %v278
    %1014 = vmatpush1.msra.mxu0 %v277
    %1015 = vmatprep.subr.mxu0 %v282
    %1016 = vmatpush1.msra.mxu0 %v281
    %1017 = vmatprep.subr.mxu0 %v286
    %1018 = vmatpush1.msra.mxu0 %v285
    %1019 = vmatprep.subr.mxu0 %v290
    %1020 = vmatpush1.msra.mxu0 %v289
    %1021 = vmatprep.subr.mxu0 %v294
    %1022 = vmatpush1.msra.mxu0 %v293
    %1023 = vmatprep.subr.mxu0 %v298
    %1024 = vmatpush1.msra.mxu0 %v297
    %1025 = vmatprep.subr.mxu0 %v302
    %1026 = vmatpush1.msra.mxu0 %v301
    %1027 = vmatprep.subr.mxu0 %v306
    %1028 = vmatpush1.msra.mxu0 %v305
    %1029 = vmatprep.subr.mxu0 %v310
    %1030 = vmatpush1.msra.mxu0 %v309
    %1031 = vmatprep.subr.mxu0 %v314
    %1032 = vmatpush1.msra.mxu0 %v313
    %1033 = vmatprep.subr.mxu0 %v318
    %1034 = vmatpush1.msra.mxu0 %v317
    %1035 = vmatprep.subr.mxu0 %v322
    %1036 = vmatpush1.msra.mxu0 %v321
    %1037 = vmatprep.subr.mxu0 %v326
    %1038 = vmatpush1.msra.mxu0 %v325
    %1039 = vmatprep.subr.mxu0 %v330
    %1040 = vmatpush1.msra.mxu0 %v329
    %1041 = vmatprep.subr.mxu0 %v334
    %1042 = vmatpush1.msra.mxu0 %v333
    %1043 = vmatprep.subr.mxu0 %v338
    %1044 = vmatpush1.msra.mxu0 %v337
    %1045 = vmatprep.subr.mxu0 %v342
    %1046 = vmatpush1.msra.mxu0 %v341
    %1047 = vmatprep.subr.mxu0 %v346
    %1048 = vmatpush1.msra.mxu0 %v345
    %1049 = vmatprep.subr.mxu0 %v350
    %1050 = vmatpush1.msra.mxu0 %v349
    %1051 = vmatprep.subr.mxu0 %v354
    %1052 = vmatpush1.msra.mxu0 %v353
    %1053 = vmatprep.subr.mxu0 %v358
    %1054 = vmatpush1.msra.mxu0 %v357
    %1055 = vmatprep.subr.mxu0 %v362
    %1056 = vmatpush1.msra.mxu0 %v361
    %1057 = vmatprep.subr.mxu0 %v366
    %1058 = vmatpush1.msra.mxu0 %v365
    %1059 = vmatprep.subr.mxu0 %v370
    %1060 = vmatpush1.msra.mxu0 %v369
    %1061 = vmatprep.subr.mxu0 %v374
    %1062 = vmatpush1.msra.mxu0 %v373
    %1063 = vmatprep.subr.mxu0 %v378
    %1064 = vmatpush1.msra.mxu0 %v377
    %1065 = vmatprep.subr.mxu0 %v382
    %1066 = vmatpush1.msra.mxu0 %v381
    %1067 = vmatprep.subr.mxu0 %v386
    %1068 = vmatpush1.msra.mxu0 %v385
    %1069 = vmatprep.subr.mxu0 %v390
    %1070 = vmatpush1.msra.mxu0 %v389
    %1071 = vmatprep.subr.mxu0 %v394
    %1072 = vmatpush1.msra.mxu0 %v393
    %1073 = vmatprep.mubr.f32.mxu0 %v698
    %1074 = vmatmul.mubr.f32.gmra.mrb[0].mxu0 %v690
    %v1075 = vpop.f32.mrb[0].mxu0
    %v1076 = vadd.f32 %v672, %v1075
    %v1077 = vpop.f32.mrb[0].mxu0
    %v1078 = vadd.f32 %v676, %v1077
    %1079 = vdwg.mxu0
    %1080 = vmatprep.subr.mxu0 %v398
    %1081 = vmatpush1.msra.mxu0 %v397
    %1082 = vmatprep.subr.mxu0 %v402
    %1083 = vmatpush1.msra.mxu0 %v401
    %1084 = vmatprep.subr.mxu0 %v406
    %1085 = vmatpush1.msra.mxu0 %v405
    %1086 = vmatprep.subr.mxu0 %v410
    %1087 = vmatpush1.msra.mxu0 %v409
    %1088 = vmatprep.subr.mxu0 %v414
    %1089 = vmatpush1.msra.mxu0 %v413
    %1090 = vmatprep.subr.mxu0 %v418
    %1091 = vmatpush1.msra.mxu0 %v417
    %1092 = vmatprep.subr.mxu0 %v422
    %1093 = vmatpush1.msra.mxu0 %v421
    %1094 = vmatprep.subr.mxu0 %v426
    %1095 = vmatpush1.msra.mxu0 %v425
    %1096 = vmatprep.subr.mxu0 %v430
    %1097 = vmatpush1.msra.mxu0 %v429
    %1098 = vmatprep.subr.mxu0 %v434
    %1099 = vmatpush1.msra.mxu0 %v433
    %1100 = vmatprep.subr.mxu0 %v438
    %1101 = vmatpush1.msra.mxu0 %v437
    %1102 = vmatprep.subr.mxu0 %v442
    %1103 = vmatpush1.msra.mxu0 %v441
    %1104 = vmatprep.subr.mxu0 %v446
    %1105 = vmatpush1.msra.mxu0 %v445
    %1106 = vmatprep.subr.mxu0 %v450
    %1107 = vmatpush1.msra.mxu0 %v449
    %1108 = vmatprep.subr.mxu0 %v454
    %1109 = vmatpush1.msra.mxu0 %v453
    %1110 = vmatprep.subr.mxu0 %v458
    %1111 = vmatpush1.msra.mxu0 %v457
    %1112 = vmatprep.subr.mxu0 %v462
    %1113 = vmatpush1.msra.mxu0 %v461
    %1114 = vmatprep.subr.mxu0 %v466
    %1115 = vmatpush1.msra.mxu0 %v465
    %1116 = vmatprep.subr.mxu0 %v470
    %1117 = vmatpush1.msra.mxu0 %v469
    %1118 = vmatprep.subr.mxu0 %v474
    %1119 = vmatpush1.msra.mxu0 %v473
    %1120 = vmatprep.subr.mxu0 %v478
    %1121 = vmatpush1.msra.mxu0 %v477
    %1122 = vmatprep.subr.mxu0 %v482
    %1123 = vmatpush1.msra.mxu0 %v481
    %1124 = vmatprep.subr.mxu0 %v486
    %1125 = vmatpush1.msra.mxu0 %v485
    %1126 = vmatprep.subr.mxu0 %v490
    %1127 = vmatpush1.msra.mxu0 %v489
    %1128 = vmatprep.subr.mxu0 %v494
    %1129 = vmatpush1.msra.mxu0 %v493
    %1130 = vmatprep.subr.mxu0 %v498
    %1131 = vmatpush1.msra.mxu0 %v497
    %1132 = vmatprep.subr.mxu0 %v502
    %1133 = vmatpush1.msra.mxu0 %v501
    %1134 = vmatprep.subr.mxu0 %v506
    %1135 = vmatpush1.msra.mxu0 %v505
    %1136 = vmatprep.subr.mxu0 %v510
    %1137 = vmatpush1.msra.mxu0 %v509
    %1138 = vmatprep.subr.mxu0 %v514
    %1139 = vmatpush1.msra.mxu0 %v513
    %1140 = vmatprep.subr.mxu0 %v518
    %1141 = vmatpush1.msra.mxu0 %v517
    %1142 = vmatprep.subr.mxu0 %v522
    %1143 = vmatpush1.msra.mxu0 %v521
    %1144 = vmatprep.mubr.f32.mxu0 %v699
    %1145 = vmatmul.mubr.f32.gmra.mrb[0].mxu0 %v697
    %v1146 = vpop.f32.mrb[0].mxu0
    %v1147 = vadd.f32 %v1076, %v1146
    %v1148 = vpop.f32.mrb[0].mxu0
    %v1149 = vadd.f32 %v1078, %v1148
    %1150 = vdwg.mxu0
    %1151 = vmatprep.subr.mxu0 %v526
    %1152 = vmatpush1.msra.mxu0 %v525
    %1153 = vmatprep.subr.mxu0 %v530
    %1154 = vmatpush1.msra.mxu0 %v529
    %1155 = vmatprep.subr.mxu0 %v534
    %1156 = vmatpush1.msra.mxu0 %v533
    %1157 = vmatprep.subr.mxu0 %v538
    %1158 = vmatpush1.msra.mxu0 %v537
    %1159 = vmatprep.subr.mxu0 %v542
    %1160 = vmatpush1.msra.mxu0 %v541
    %1161 = vmatprep.subr.mxu0 %v546
    %1162 = vmatpush1.msra.mxu0 %v545
    %1163 = vmatprep.subr.mxu0 %v550
    %1164 = vmatpush1.msra.mxu0 %v549
    %1165 = vmatprep.subr.mxu0 %v554
    %1166 = vmatpush1.msra.mxu0 %v553
    %1167 = vmatprep.subr.mxu0 %v558
    %1168 = vmatpush1.msra.mxu0 %v557
    %1169 = vmatprep.subr.mxu0 %v562
    %1170 = vmatpush1.msra.mxu0 %v561
    %1171 = vmatprep.subr.mxu0 %v566
    %1172 = vmatpush1.msra.mxu0 %v565
    %1173 = vmatprep.subr.mxu0 %v570
    %1174 = vmatpush1.msra.mxu0 %v569
    %1175 = vmatprep.subr.mxu0 %v574
    %1176 = vmatpush1.msra.mxu0 %v573
    %1177 = vmatprep.subr.mxu0 %v578
    %1178 = vmatpush1.msra.mxu0 %v577
    %1179 = vmatprep.subr.mxu0 %v582
    %1180 = vmatpush1.msra.mxu0 %v581
    %1181 = vmatprep.subr.mxu0 %v586
    %1182 = vmatpush1.msra.mxu0 %v585
    %1183 = vmatprep.subr.mxu0 %v590
    %1184 = vmatpush1.msra.mxu0 %v589
    %1185 = vmatprep.subr.mxu0 %v594
    %1186 = vmatpush1.msra.mxu0 %v593
    %1187 = vmatprep.subr.mxu0 %v598
    %1188 = vmatpush1.msra.mxu0 %v597
    %1189 = vmatprep.subr.mxu0 %v602
    %1190 = vmatpush1.msra.mxu0 %v601
    %1191 = vmatprep.subr.mxu0 %v606
    %1192 = vmatpush1.msra.mxu0 %v605
    %1193 = vmatprep.subr.mxu0 %v610
    %1194 = vmatpush1.msra.mxu0 %v609
    %1195 = vmatprep.subr.mxu0 %v614
    %1196 = vmatpush1.msra.mxu0 %v613
    %1197 = vmatprep.subr.mxu0 %v618
    %1198 = vmatpush1.msra.mxu0 %v617
    %1199 = vmatprep.subr.mxu0 %v622
    %1200 = vmatpush1.msra.mxu0 %v621
    %1201 = vmatprep.subr.mxu0 %v626
    %1202 = vmatpush1.msra.mxu0 %v625
    %1203 = vmatprep.subr.mxu0 %v630
    %1204 = vmatpush1.msra.mxu0 %v629
    %1205 = vmatprep.subr.mxu0 %v634
    %1206 = vmatpush1.msra.mxu0 %v633
    %1207 = vmatprep.subr.mxu0 %v638
    %1208 = vmatpush1.msra.mxu0 %v637
    %1209 = vmatprep.subr.mxu0 %v642
    %1210 = vmatpush1.msra.mxu0 %v641
    %1211 = vmatprep.subr.mxu0 %v646
    %1212 = vmatpush1.msra.mxu0 %v645
    %1213 = vmatprep.subr.mxu0 %v650
    %1214 = vmatpush1.msra.mxu0 %v649
    %1215 = vmatprep.mubr.f32.mxu0 %v715
    %1216 = vmatmul.mubr.f32.gmra.mrb[0].mxu0 %v707
    %v1217 = vpop.f32.mrb[0].mxu0
    %v1218 = vadd.f32 %v1147, %v1217
    %v1219 = vpop.f32.mrb[0].mxu0
    %v1220 = vadd.f32 %v1149, %v1219
    %1221 = vdwg.mxu0
    %1222 = vmatprep.subr.mxu0 %v654
    %1223 = vmatpush1.msra.mxu0 %v653
    %1224 = vmatprep.subr.mxu0 %v658
    %1225 = vmatpush1.msra.mxu0 %v657
    %1226 = vmatprep.subr.mxu0 0.0
    %1227 = vmatpush1.msra.mxu0 0.0
    %1228 = vmatprep.subr.mxu0 0.0
    %1229 = vmatpush1.msra.mxu0 0.0
    %1230 = vmatprep.subr.mxu0 0.0
    %1231 = vmatpush1.msra.mxu0 0.0
    %1232 = vmatprep.subr.mxu0 0.0
    %1233 = vmatpush1.msra.mxu0 0.0
    %1234 = vmatprep.subr.mxu0 0.0
    %1235 = vmatpush1.msra.mxu0 0.0
    %1236 = vmatprep.subr.mxu0 0.0
    %1237 = vmatpush1.msra.mxu0 0.0
    %1238 = vmatprep.subr.mxu0 0.0
    %1239 = vmatpush1.msra.mxu0 0.0
    %1240 = vmatprep.subr.mxu0 0.0
    %1241 = vmatpush1.msra.mxu0 0.0
    %1242 = vmatprep.subr.mxu0 0.0
    %1243 = vmatpush1.msra.mxu0 0.0
    %1244 = vmatprep.subr.mxu0 0.0
    %1245 = vmatpush1.msra.mxu0 0.0
    %1246 = vmatprep.subr.mxu0 0.0
    %1247 = vmatpush1.msra.mxu0 0.0
    %1248 = vmatprep.subr.mxu0 0.0
    %1249 = vmatpush1.msra.mxu0 0.0
    %1250 = vmatprep.subr.mxu0 0.0
    %1251 = vmatpush1.msra.mxu0 0.0
    %1252 = vmatprep.subr.mxu0 0.0
    %1253 = vmatpush1.msra.mxu0 0.0
    %1254 = vmatprep.subr.mxu0 0.0
    %1255 = vmatpush1.msra.mxu0 0.0
    %1256 = vmatprep.subr.mxu0 0.0
    %1257 = vmatpush1.msra.mxu0 0.0
    %1258 = vmatprep.subr.mxu0 0.0
    %1259 = vmatpush1.msra.mxu0 0.0
    %1260 = vmatprep.subr.mxu0 0.0
    %1261 = vmatpush1.msra.mxu0 0.0
    %1262 = vmatprep.subr.mxu0 0.0
    %1263 = vmatpush1.msra.mxu0 0.0
    %1264 = vmatprep.subr.mxu0 0.0
    %1265 = vmatpush1.msra.mxu0 0.0
    %1266 = vmatprep.subr.mxu0 0.0
    %1267 = vmatpush1.msra.mxu0 0.0
    %1268 = vmatprep.subr.mxu0 0.0
    %1269 = vmatpush1.msra.mxu0 0.0
    %1270 = vmatprep.subr.mxu0 0.0
    %1271 = vmatpush1.msra.mxu0 0.0
    %1272 = vmatprep.subr.mxu0 0.0
    %1273 = vmatpush1.msra.mxu0 0.0
    %1274 = vmatprep.subr.mxu0 0.0
    %1275 = vmatpush1.msra.mxu0 0.0
    %1276 = vmatprep.subr.mxu0 0.0
    %1277 = vmatpush1.msra.mxu0 0.0
    %1278 = vmatprep.subr.mxu0 0.0
    %1279 = vmatpush1.msra.mxu0 0.0
    %1280 = vmatprep.subr.mxu0 0.0
    %1281 = vmatpush1.msra.mxu0 0.0
    %1282 = vmatprep.subr.mxu0 0.0
    %1283 = vmatpush1.msra.mxu0 0.0
    %1284 = vmatprep.subr.mxu0 0.0
    %1285 = vmatpush1.msra.mxu0 0.0
    %1286 = vmatprep.mubr.f32.mxu0 0.0
    %1287 = vmatmul.mubr.f32.gmra.mrb[0].mxu0 %v723
    %v1288 = vpop.f32.mrb[0].mxu0
    %v1289 = vadd.f32 %v1218, %v1288
    %v1290 = vpop.f32.mrb[0].mxu0
    %v1291 = vadd.f32 %v1220, %v1290
    %1292 = vdwg.mxu0
    %v1293 = vmax.f32 %v1005, 0.0
    %v1294 = vmax.f32 %v1007, 0.0
    %v1295 = vmax.f32 %v1289, 0.0
    %v1296 = vmax.f32 %v1291, 0.0
    %v1297 = vld [vmem:[#allocation7] sm:$0xff]
    %v1298 = vld [vmem:[#allocation7 + $0xc] sm:$0xff]
    %v1299 = vld [vmem:[#allocation7 + $0x18] sm:$0xff]
    %v1300 = vld [vmem:[#allocation7 + $0x24] sm:$0xff]
    %v1301 = vld [vmem:[#allocation7 + $0x30] sm:$0xff]
    %v1302 = vld [vmem:[#allocation7 + $0x3c] sm:$0xff]
    %v1303 = vld [vmem:[#allocation7 + $0x48] sm:$0xff]
    %v1304 = vld [vmem:[#allocation7 + $0x54] sm:$0xff]
    %v1305 = vld [vmem:[#allocation7 + $0x60] sm:$0xff]
    %v1306 = vld [vmem:[#allocation7 + $0x6c] sm:$0xff]
    %v1307 = vld [vmem:[#allocation7 + $0x78] sm:$0xff]
    %v1308 = vld [vmem:[#allocation7 + $0x84] sm:$0xff]
    %v1309 = vld [vmem:[#allocation7 + $0x90] sm:$0xff]
    %v1310 = vld [vmem:[#allocation7 + $0x9c] sm:$0xff]
    %v1311 = vld [vmem:[#allocation7 + $0xa8] sm:$0xff]
    %v1312 = vld [vmem:[#allocation7 + $0xb4] sm:$0xff]
    %v1313 = vld [vmem:[#allocation7 + $0xc0] sm:$0xff]
    %v1314 = vld [vmem:[#allocation7 + $0xcc] sm:$0xff]
    %v1315 = vld [vmem:[#allocation7 + $0xd8] sm:$0xff]
    %v1316 = vld [vmem:[#allocation7 + $0xe4] sm:$0xff]
    %v1317 = vld [vmem:[#allocation7 + $0xf0] sm:$0xff]
    %v1318 = vld [vmem:[#allocation7 + $0xfc] sm:$0xff]
    %v1319 = vld [vmem:[#allocation7 + $0x108] sm:$0xff]
    %v1320 = vld [vmem:[#allocation7 + $0x114] sm:$0xff]
    %v1321 = vld [vmem:[#allocation7 + $0x120] sm:$0xff]
    %v1322 = vld [vmem:[#allocation7 + $0x12c] sm:$0xff]
    %v1323 = vld [vmem:[#allocation7 + $0x138] sm:$0xff]
    %v1324 = vld [vmem:[#allocation7 + $0x144] sm:$0xff]
    %v1325 = vld [vmem:[#allocation7 + $0x150] sm:$0xff]
    %v1326 = vld [vmem:[#allocation7 + $0x15c] sm:$0xff]
    %v1327 = vld [vmem:[#allocation7 + $0x168] sm:$0xff]
    %v1328 = vld [vmem:[#allocation7 + $0x174] sm:$0xff]
    %v1329 = vld [vmem:[#allocation7 + $0x180] sm:$0xff]
    %v1330 = vld [vmem:[#allocation7 + $0x18c] sm:$0xff]
    %v1331 = vld [vmem:[#allocation7 + $0x198] sm:$0xff]
    %v1332 = vld [vmem:[#allocation7 + $0x1a4] sm:$0xff]
    %v1333 = vld [vmem:[#allocation7 + $0x1b0] sm:$0xff]
    %v1334 = vld [vmem:[#allocation7 + $0x1bc] sm:$0xff]
    %v1335 = vld [vmem:[#allocation7 + $0x1c8] sm:$0xff]
    %v1336 = vld [vmem:[#allocation7 + $0x1d4] sm:$0xff]
    %v1337 = vld [vmem:[#allocation7 + $0x1e0] sm:$0xff]
    %v1338 = vld [vmem:[#allocation7 + $0x1ec] sm:$0xff]
    %v1339 = vld [vmem:[#allocation7 + $0x1f8] sm:$0xff]
    %v1340 = vld [vmem:[#allocation7 + $0x204] sm:$0xff]
    %v1341 = vld [vmem:[#allocation7 + $0x210] sm:$0xff]
    %v1342 = vld [vmem:[#allocation7 + $0x21c] sm:$0xff]
    %v1343 = vld [vmem:[#allocation7 + $0x228] sm:$0xff]
    %v1344 = vld [vmem:[#allocation7 + $0x234] sm:$0xff]
    %v1345 = vld [vmem:[#allocation7 + $0x240] sm:$0xff]
    %v1346 = vld [vmem:[#allocation7 + $0x24c] sm:$0xff]
    %v1347 = vld [vmem:[#allocation7 + $0x258] sm:$0xff]
    %v1348 = vld [vmem:[#allocation7 + $0x264] sm:$0xff]
    %v1349 = vld [vmem:[#allocation7 + $0x270] sm:$0xff]
    %v1350 = vld [vmem:[#allocation7 + $0x27c] sm:$0xff]
    %v1351 = vld [vmem:[#allocation7 + $0x288] sm:$0xff]
    %v1352 = vld [vmem:[#allocation7 + $0x294] sm:$0xff]
    %v1353 = vld [vmem:[#allocation7 + $0x2a0] sm:$0xff]
    %v1354 = vld [vmem:[#allocation7 + $0x2ac] sm:$0xff]
    %v1355 = vld [vmem:[#allocation7 + $0x2b8] sm:$0xff]
    %v1356 = vld [vmem:[#allocation7 + $0x2c4] sm:$0xff]
    %v1357 = vld [vmem:[#allocation7 + $0x2d0] sm:$0xff]
    %v1358 = vld [vmem:[#allocation7 + $0x2dc] sm:$0xff]
    %v1359 = vld [vmem:[#allocation7 + $0x2e8] sm:$0xff]
    %v1360 = vld [vmem:[#allocation7 + $0x2f4] sm:$0xff]
    %v1361 = vunpack.c.l.bf16 %v1297
    %v1362 = vunpack.c.h.bf16 %v1297
    %v1363 = vunpack.c.l.bf16 %v1298
    %v1364 = vunpack.c.h.bf16 %v1298
    %v1365 = vunpack.c.l.bf16 %v1299
    %v1366 = vunpack.c.h.bf16 %v1299
    %v1367 = vunpack.c.l.bf16 %v1300
    %v1368 = vunpack.c.h.bf16 %v1300
    %v1369 = vunpack.c.l.bf16 %v1301
    %v1370 = vunpack.c.h.bf16 %v1301
    %v1371 = vunpack.c.l.bf16 %v1302
    %v1372 = vunpack.c.h.bf16 %v1302
    %v1373 = vunpack.c.l.bf16 %v1303
    %v1374 = vunpack.c.h.bf16 %v1303
    %v1375 = vunpack.c.l.bf16 %v1304
    %v1376 = vunpack.c.h.bf16 %v1304
    %v1377 = vunpack.c.l.bf16 %v1305
    %v1378 = vunpack.c.h.bf16 %v1305
    %v1379 = vunpack.c.l.bf16 %v1306
    %v1380 = vunpack.c.h.bf16 %v1306
    %v1381 = vunpack.c.l.bf16 %v1307
    %v1382 = vunpack.c.h.bf16 %v1307
    %v1383 = vunpack.c.l.bf16 %v1308
    %v1384 = vunpack.c.h.bf16 %v1308
    %v1385 = vunpack.c.l.bf16 %v1309
    %v1386 = vunpack.c.h.bf16 %v1309
    %v1387 = vunpack.c.l.bf16 %v1310
    %v1388 = vunpack.c.h.bf16 %v1310
    %v1389 = vunpack.c.l.bf16 %v1311
    %v1390 = vunpack.c.h.bf16 %v1311
    %v1391 = vunpack.c.l.bf16 %v1312
    %v1392 = vunpack.c.h.bf16 %v1312
    %v1393 = vunpack.c.l.bf16 %v1313
    %v1394 = vunpack.c.h.bf16 %v1313
    %v1395 = vunpack.c.l.bf16 %v1314
    %v1396 = vunpack.c.h.bf16 %v1314
    %v1397 = vunpack.c.l.bf16 %v1315
    %v1398 = vunpack.c.h.bf16 %v1315
    %v1399 = vunpack.c.l.bf16 %v1316
    %v1400 = vunpack.c.h.bf16 %v1316
    %v1401 = vunpack.c.l.bf16 %v1317
    %v1402 = vunpack.c.h.bf16 %v1317
    %v1403 = vunpack.c.l.bf16 %v1318
    %v1404 = vunpack.c.h.bf16 %v1318
    %v1405 = vunpack.c.l.bf16 %v1319
    %v1406 = vunpack.c.h.bf16 %v1319
    %v1407 = vunpack.c.l.bf16 %v1320
    %v1408 = vunpack.c.h.bf16 %v1320
    %v1409 = vunpack.c.l.bf16 %v1321
    %v1410 = vunpack.c.h.bf16 %v1321
    %v1411 = vunpack.c.l.bf16 %v1322
    %v1412 = vunpack.c.h.bf16 %v1322
    %v1413 = vunpack.c.l.bf16 %v1323
    %v1414 = vunpack.c.h.bf16 %v1323
    %v1415 = vunpack.c.l.bf16 %v1324
    %v1416 = vunpack.c.h.bf16 %v1324
    %v1417 = vunpack.c.l.bf16 %v1325
    %v1418 = vunpack.c.h.bf16 %v1325
    %v1419 = vunpack.c.l.bf16 %v1326
    %v1420 = vunpack.c.h.bf16 %v1326
    %v1421 = vunpack.c.l.bf16 %v1327
    %v1422 = vunpack.c.h.bf16 %v1327
    %v1423 = vunpack.c.l.bf16 %v1328
    %v1424 = vunpack.c.h.bf16 %v1328
    %v1425 = vunpack.c.l.bf16 %v1329
    %v1426 = vunpack.c.h.bf16 %v1329
    %v1427 = vunpack.c.l.bf16 %v1330
    %v1428 = vunpack.c.h.bf16 %v1330
    %v1429 = vunpack.c.l.bf16 %v1331
    %v1430 = vunpack.c.h.bf16 %v1331
    %v1431 = vunpack.c.l.bf16 %v1332
    %v1432 = vunpack.c.h.bf16 %v1332
    %v1433 = vunpack.c.l.bf16 %v1333
    %v1434 = vunpack.c.h.bf16 %v1333
    %v1435 = vunpack.c.l.bf16 %v1334
    %v1436 = vunpack.c.h.bf16 %v1334
    %v1437 = vunpack.c.l.bf16 %v1335
    %v1438 = vunpack.c.h.bf16 %v1335
    %v1439 = vunpack.c.l.bf16 %v1336
    %v1440 = vunpack.c.h.bf16 %v1336
    %v1441 = vunpack.c.l.bf16 %v1337
    %v1442 = vunpack.c.h.bf16 %v1337
    %v1443 = vunpack.c.l.bf16 %v1338
    %v1444 = vunpack.c.h.bf16 %v1338
    %v1445 = vunpack.c.l.bf16 %v1339
    %v1446 = vunpack.c.h.bf16 %v1339
    %v1447 = vunpack.c.l.bf16 %v1340
    %v1448 = vunpack.c.h.bf16 %v1340
    %v1449 = vunpack.c.l.bf16 %v1341
    %v1450 = vunpack.c.h.bf16 %v1341
    %v1451 = vunpack.c.l.bf16 %v1342
    %v1452 = vunpack.c.h.bf16 %v1342
    %v1453 = vunpack.c.l.bf16 %v1343
    %v1454 = vunpack.c.h.bf16 %v1343
    %v1455 = vunpack.c.l.bf16 %v1344
    %v1456 = vunpack.c.h.bf16 %v1344
    %v1457 = vunpack.c.l.bf16 %v1345
    %v1458 = vunpack.c.h.bf16 %v1345
    %v1459 = vunpack.c.l.bf16 %v1346
    %v1460 = vunpack.c.h.bf16 %v1346
    %v1461 = vunpack.c.l.bf16 %v1347
    %v1462 = vunpack.c.h.bf16 %v1347
    %v1463 = vunpack.c.l.bf16 %v1348
    %v1464 = vunpack.c.h.bf16 %v1348
    %v1465 = vunpack.c.l.bf16 %v1349
    %v1466 = vunpack.c.h.bf16 %v1349
    %v1467 = vunpack.c.l.bf16 %v1350
    %v1468 = vunpack.c.h.bf16 %v1350
    %v1469 = vunpack.c.l.bf16 %v1351
    %v1470 = vunpack.c.h.bf16 %v1351
    %v1471 = vunpack.c.l.bf16 %v1352
    %v1472 = vunpack.c.h.bf16 %v1352
    %v1473 = vunpack.c.l.bf16 %v1353
    %v1474 = vunpack.c.h.bf16 %v1353
    %v1475 = vunpack.c.l.bf16 %v1354
    %v1476 = vunpack.c.h.bf16 %v1354
    %v1477 = vunpack.c.l.bf16 %v1355
    %v1478 = vunpack.c.h.bf16 %v1355
    %v1479 = vunpack.c.l.bf16 %v1356
    %v1480 = vunpack.c.h.bf16 %v1356
    %v1481 = vunpack.c.l.bf16 %v1357
    %v1482 = vunpack.c.h.bf16 %v1357
    %v1483 = vunpack.c.l.bf16 %v1358
    %v1484 = vunpack.c.h.bf16 %v1358
    %v1485 = vunpack.c.l.bf16 %v1359
    %v1486 = vunpack.c.h.bf16 %v1359
    %v1487 = vunpack.c.l.bf16 %v1360
    %v1488 = vunpack.c.h.bf16 %v1360
    %s1489 = scalar_lea.vmem [#allocation8], 1
    %v1490 = vld [vmem:[%s1489] ss:$8 sm:$0x3]
    %v1492 = vlaneseq
    %v1493 = vshrl.u32 %v1492, 7
    %v1494 = vsub.s32 0, %v1493
    %v1495 = vrot.slane %v1490, %v1494
    %v1496 = vlaneseq
    %v1497 = vshrl.u32 %v1496, 7
    %v1498 = vsub.s32 1, %v1497
    %v1499 = vrot.slane %v1490, %v1498
    %1502 = vmatprep.subr.mxu0 %v1362
    %1503 = vmatpush1.msra.mxu0 %v1361
    %1504 = vmatprep.subr.mxu0 %v1364
    %1505 = vmatpush1.msra.mxu0 %v1363
    %1506 = vmatprep.subr.mxu0 %v1366
    %1507 = vmatpush1.msra.mxu0 %v1365
    %1508 = vmatprep.subr.mxu0 %v1368
    %1509 = vmatpush1.msra.mxu0 %v1367
    %1510 = vmatprep.subr.mxu0 %v1370
    %1511 = vmatpush1.msra.mxu0 %v1369
    %1512 = vmatprep.subr.mxu0 %v1372
    %1513 = vmatpush1.msra.mxu0 %v1371
    %1514 = vmatprep.subr.mxu0 %v1374
    %1515 = vmatpush1.msra.mxu0 %v1373
    %1516 = vmatprep.subr.mxu0 %v1376
    %1517 = vmatpush1.msra.mxu0 %v1375
    %1518 = vmatprep.subr.mxu0 %v1378
    %1519 = vmatpush1.msra.mxu0 %v1377
    %1520 = vmatprep.subr.mxu0 %v1380
    %1521 = vmatpush1.msra.mxu0 %v1379
    %1522 = vmatprep.subr.mxu0 %v1382
    %1523 = vmatpush1.msra.mxu0 %v1381
    %1524 = vmatprep.subr.mxu0 %v1384
    %1525 = vmatpush1.msra.mxu0 %v1383
    %1526 = vmatprep.subr.mxu0 %v1386
    %1527 = vmatpush1.msra.mxu0 %v1385
    %1528 = vmatprep.subr.mxu0 %v1388
    %1529 = vmatpush1.msra.mxu0 %v1387
    %1530 = vmatprep.subr.mxu0 %v1390
    %1531 = vmatpush1.msra.mxu0 %v1389
    %1532 = vmatprep.subr.mxu0 %v1392
    %1533 = vmatpush1.msra.mxu0 %v1391
    %1534 = vmatprep.subr.mxu0 %v1394
    %1535 = vmatpush1.msra.mxu0 %v1393
    %1536 = vmatprep.subr.mxu0 %v1396
    %1537 = vmatpush1.msra.mxu0 %v1395
    %1538 = vmatprep.subr.mxu0 %v1398
    %1539 = vmatpush1.msra.mxu0 %v1397
    %1540 = vmatprep.subr.mxu0 %v1400
    %1541 = vmatpush1.msra.mxu0 %v1399
    %1542 = vmatprep.subr.mxu0 %v1402
    %1543 = vmatpush1.msra.mxu0 %v1401
    %1544 = vmatprep.subr.mxu0 %v1404
    %1545 = vmatpush1.msra.mxu0 %v1403
    %1546 = vmatprep.subr.mxu0 %v1406
    %1547 = vmatpush1.msra.mxu0 %v1405
    %1548 = vmatprep.subr.mxu0 %v1408
    %1549 = vmatpush1.msra.mxu0 %v1407
    %1550 = vmatprep.subr.mxu0 %v1410
    %1551 = vmatpush1.msra.mxu0 %v1409
    %1552 = vmatprep.subr.mxu0 %v1412
    %1553 = vmatpush1.msra.mxu0 %v1411
    %1554 = vmatprep.subr.mxu0 %v1414
    %1555 = vmatpush1.msra.mxu0 %v1413
    %1556 = vmatprep.subr.mxu0 %v1416
    %1557 = vmatpush1.msra.mxu0 %v1415
    %1558 = vmatprep.subr.mxu0 %v1418
    %1559 = vmatpush1.msra.mxu0 %v1417
    %1560 = vmatprep.subr.mxu0 %v1420
    %1561 = vmatpush1.msra.mxu0 %v1419
    %1562 = vmatprep.subr.mxu0 %v1422
    %1563 = vmatpush1.msra.mxu0 %v1421
    %1564 = vmatprep.subr.mxu0 %v1424
    %1565 = vmatpush1.msra.mxu0 %v1423
    %1566 = vmatprep.mubr.f32.mxu0 %v1294
    %1567 = vmatmul.mubr.f32.gmra.mrb[0].mxu0 %v1293
    %v1568 = vpop.f32.mrb[0].mxu0
    %v1569 = vadd.f32 %v1495, %v1568
    %v1570 = vpop.f32.mrb[0].mxu0
    %v1571 = vadd.f32 %v1499, %v1570
    %1572 = vdwg.mxu0
    %1573 = vmatprep.subr.mxu0 %v1426
    %1574 = vmatpush1.msra.mxu0 %v1425
    %1575 = vmatprep.subr.mxu0 %v1428
    %1576 = vmatpush1.msra.mxu0 %v1427
    %1577 = vmatprep.subr.mxu0 %v1430
    %1578 = vmatpush1.msra.mxu0 %v1429
    %1579 = vmatprep.subr.mxu0 %v1432
    %1580 = vmatpush1.msra.mxu0 %v1431
    %1581 = vmatprep.subr.mxu0 %v1434
    %1582 = vmatpush1.msra.mxu0 %v1433
    %1583 = vmatprep.subr.mxu0 %v1436
    %1584 = vmatpush1.msra.mxu0 %v1435
    %1585 = vmatprep.subr.mxu0 %v1438
    %1586 = vmatpush1.msra.mxu0 %v1437
    %1587 = vmatprep.subr.mxu0 %v1440
    %1588 = vmatpush1.msra.mxu0 %v1439
    %1589 = vmatprep.subr.mxu0 %v1442
    %1590 = vmatpush1.msra.mxu0 %v1441
    %1591 = vmatprep.subr.mxu0 %v1444
    %1592 = vmatpush1.msra.mxu0 %v1443
    %1593 = vmatprep.subr.mxu0 %v1446
    %1594 = vmatpush1.msra.mxu0 %v1445
    %1595 = vmatprep.subr.mxu0 %v1448
    %1596 = vmatpush1.msra.mxu0 %v1447
    %1597 = vmatprep.subr.mxu0 %v1450
    %1598 = vmatpush1.msra.mxu0 %v1449
    %1599 = vmatprep.subr.mxu0 %v1452
    %1600 = vmatpush1.msra.mxu0 %v1451
    %1601 = vmatprep.subr.mxu0 %v1454
    %1602 = vmatpush1.msra.mxu0 %v1453
    %1603 = vmatprep.subr.mxu0 %v1456
    %1604 = vmatpush1.msra.mxu0 %v1455
    %1605 = vmatprep.subr.mxu0 %v1458
    %1606 = vmatpush1.msra.mxu0 %v1457
    %1607 = vmatprep.subr.mxu0 %v1460
    %1608 = vmatpush1.msra.mxu0 %v1459
    %1609 = vmatprep.subr.mxu0 %v1462
    %1610 = vmatpush1.msra.mxu0 %v1461
    %1611 = vmatprep.subr.mxu0 %v1464
    %1612 = vmatpush1.msra.mxu0 %v1463
    %1613 = vmatprep.subr.mxu0 %v1466
    %1614 = vmatpush1.msra.mxu0 %v1465
    %1615 = vmatprep.subr.mxu0 %v1468
    %1616 = vmatpush1.msra.mxu0 %v1467
    %1617 = vmatprep.subr.mxu0 %v1470
    %1618 = vmatpush1.msra.mxu0 %v1469
    %1619 = vmatprep.subr.mxu0 %v1472
    %1620 = vmatpush1.msra.mxu0 %v1471
    %1621 = vmatprep.subr.mxu0 %v1474
    %1622 = vmatpush1.msra.mxu0 %v1473
    %1623 = vmatprep.subr.mxu0 %v1476
    %1624 = vmatpush1.msra.mxu0 %v1475
    %1625 = vmatprep.subr.mxu0 %v1478
    %1626 = vmatpush1.msra.mxu0 %v1477
    %1627 = vmatprep.subr.mxu0 %v1480
    %1628 = vmatpush1.msra.mxu0 %v1479
    %1629 = vmatprep.subr.mxu0 %v1482
    %1630 = vmatpush1.msra.mxu0 %v1481
    %1631 = vmatprep.subr.mxu0 %v1484
    %1632 = vmatpush1.msra.mxu0 %v1483
    %1633 = vmatprep.subr.mxu0 %v1486
    %1634 = vmatpush1.msra.mxu0 %v1485
    %1635 = vmatprep.subr.mxu0 %v1488
    %1636 = vmatpush1.msra.mxu0 %v1487
    %1637 = vmatprep.mubr.f32.mxu0 %v1296
    %1638 = vmatmul.mubr.f32.gmra.mrb[0].mxu0 %v1295
    %v1639 = vpop.f32.mrb[0].mxu0
    %v1640 = vadd.f32 %v1569, %v1639
    %v1641 = vpop.f32.mrb[0].mxu0
    %v1642 = vadd.f32 %v1571, %v1641
    %1643 = vdwg.mxu0
    %v1644 = vmax.f32 %v1640, 0.0
    %v1645 = vmax.f32 %v1642, 0.0
    %v1646 = vld [vmem:[#allocation7 + $0x8] sm:$0xf]
    %v1647 = vld [vmem:[#allocation7 + $0x14] sm:$0xf]
    %v1648 = vld [vmem:[#allocation7 + $0x20] sm:$0xf]
    %v1649 = vld [vmem:[#allocation7 + $0x2c] sm:$0xf]
    %v1650 = vld [vmem:[#allocation7 + $0x38] sm:$0xf]
    %v1651 = vld [vmem:[#allocation7 + $0x44] sm:$0xf]
    %v1652 = vld [vmem:[#allocation7 + $0x50] sm:$0xf]
    %v1653 = vld [vmem:[#allocation7 + $0x5c] sm:$0xf]
    %v1654 = vld [vmem:[#allocation7 + $0x68] sm:$0xf]
    %v1655 = vld [vmem:[#allocation7 + $0x74] sm:$0xf]
    %v1656 = vld [vmem:[#allocation7 + $0x80] sm:$0xf]
    %v1657 = vld [vmem:[#allocation7 + $0x8c] sm:$0xf]
    %v1658 = vld [vmem:[#allocation7 + $0x98] sm:$0xf]
    %v1659 = vld [vmem:[#allocation7 + $0xa4] sm:$0xf]
    %v1660 = vld [vmem:[#allocation7 + $0xb0] sm:$0xf]
    %v1661 = vld [vmem:[#allocation7 + $0xbc] sm:$0xf]
    %v1662 = vld [vmem:[#allocation7 + $0xc8] sm:$0xf]
    %v1663 = vld [vmem:[#allocation7 + $0xd4] sm:$0xf]
    %v1664 = vld [vmem:[#allocation7 + $0xe0] sm:$0xf]
    %v1665 = vld [vmem:[#allocation7 + $0xec] sm:$0xf]
    %v1666 = vld [vmem:[#allocation7 + $0xf8] sm:$0xf]
    %v1667 = vld [vmem:[#allocation7 + $0x104] sm:$0xf]
    %v1668 = vld [vmem:[#allocation7 + $0x110] sm:$0xf]
    %v1669 = vld [vmem:[#allocation7 + $0x11c] sm:$0xf]
    %v1670 = vld [vmem:[#allocation7 + $0x128] sm:$0xf]
    %v1671 = vld [vmem:[#allocation7 + $0x134] sm:$0xf]
    %v1672 = vld [vmem:[#allocation7 + $0x140] sm:$0xf]
    %v1673 = vld [vmem:[#allocation7 + $0x14c] sm:$0xf]
    %v1674 = vld [vmem:[#allocation7 + $0x158] sm:$0xf]
    %v1675 = vld [vmem:[#allocation7 + $0x164] sm:$0xf]
    %v1676 = vld [vmem:[#allocation7 + $0x170] sm:$0xf]
    %v1677 = vld [vmem:[#allocation7 + $0x17c] sm:$0xf]
    %v1678 = vunpack.c.l.bf16 %v1646
    %v1679 = vunpack.c.l.bf16 %v1647
    %v1680 = vunpack.c.l.bf16 %v1648
    %v1681 = vunpack.c.l.bf16 %v1649
    %v1682 = vunpack.c.l.bf16 %v1650
    %v1683 = vunpack.c.l.bf16 %v1651
    %v1684 = vunpack.c.l.bf16 %v1652
    %v1685 = vunpack.c.l.bf16 %v1653
    %v1686 = vunpack.c.l.bf16 %v1654
    %v1687 = vunpack.c.l.bf16 %v1655
    %v1688 = vunpack.c.l.bf16 %v1656
    %v1689 = vunpack.c.l.bf16 %v1657
    %v1690 = vunpack.c.l.bf16 %v1658
    %v1691 = vunpack.c.l.bf16 %v1659
    %v1692 = vunpack.c.l.bf16 %v1660
    %v1693 = vunpack.c.l.bf16 %v1661
    %v1694 = vunpack.c.l.bf16 %v1662
    %v1695 = vunpack.c.l.bf16 %v1663
    %v1696 = vunpack.c.l.bf16 %v1664
    %v1697 = vunpack.c.l.bf16 %v1665
    %v1698 = vunpack.c.l.bf16 %v1666
    %v1699 = vunpack.c.l.bf16 %v1667
    %v1700 = vunpack.c.l.bf16 %v1668
    %v1701 = vunpack.c.l.bf16 %v1669
    %v1702 = vunpack.c.l.bf16 %v1670
    %v1703 = vunpack.c.l.bf16 %v1671
    %v1704 = vunpack.c.l.bf16 %v1672
    %v1705 = vunpack.c.l.bf16 %v1673
    %v1706 = vunpack.c.l.bf16 %v1674
    %v1707 = vunpack.c.l.bf16 %v1675
    %v1708 = vunpack.c.l.bf16 %v1676
    %v1709 = vunpack.c.l.bf16 %v1677
    %v1710 = vld [vmem:[#allocation8 + $0x2] ss:$0 sm:$0xff]
    %1711 = vmatprep.subr.mxu0 0.0
    %1712 = vmatpush1.msra.mxu0 %v1678
    %1713 = vmatprep.subr.mxu0 0.0
    %1714 = vmatpush1.msra.mxu0 %v1679
    %1715 = vmatprep.subr.mxu0 0.0
    %1716 = vmatpush1.msra.mxu0 %v1680
    %1717 = vmatprep.subr.mxu0 0.0
    %1718 = vmatpush1.msra.mxu0 %v1681
    %1719 = vmatprep.subr.mxu0 0.0
    %1720 = vmatpush1.msra.mxu0 %v1682
    %1721 = vmatprep.subr.mxu0 0.0
    %1722 = vmatpush1.msra.mxu0 %v1683
    %1723 = vmatprep.subr.mxu0 0.0
    %1724 = vmatpush1.msra.mxu0 %v1684
    %1725 = vmatprep.subr.mxu0 0.0
    %1726 = vmatpush1.msra.mxu0 %v1685
    %1727 = vmatprep.subr.mxu0 0.0
    %1728 = vmatpush1.msra.mxu0 %v1686
    %1729 = vmatprep.subr.mxu0 0.0
    %1730 = vmatpush1.msra.mxu0 %v1687
    %1731 = vmatprep.subr.mxu0 0.0
    %1732 = vmatpush1.msra.mxu0 %v1688
    %1733 = vmatprep.subr.mxu0 0.0
    %1734 = vmatpush1.msra.mxu0 %v1689
    %1735 = vmatprep.subr.mxu0 0.0
    %1736 = vmatpush1.msra.mxu0 %v1690
    %1737 = vmatprep.subr.mxu0 0.0
    %1738 = vmatpush1.msra.mxu0 %v1691
    %1739 = vmatprep.subr.mxu0 0.0
    %1740 = vmatpush1.msra.mxu0 %v1692
    %1741 = vmatprep.subr.mxu0 0.0
    %1742 = vmatpush1.msra.mxu0 %v1693
    %1743 = vmatprep.subr.mxu0 0.0
    %1744 = vmatpush1.msra.mxu0 %v1694
    %1745 = vmatprep.subr.mxu0 0.0
    %1746 = vmatpush1.msra.mxu0 %v1695
    %1747 = vmatprep.subr.mxu0 0.0
    %1748 = vmatpush1.msra.mxu0 %v1696
    %1749 = vmatprep.subr.mxu0 0.0
    %1750 = vmatpush1.msra.mxu0 %v1697
    %1751 = vmatprep.subr.mxu0 0.0
    %1752 = vmatpush1.msra.mxu0 %v1698
    %1753 = vmatprep.subr.mxu0 0.0
    %1754 = vmatpush1.msra.mxu0 %v1699
    %1755 = vmatprep.subr.mxu0 0.0
    %1756 = vmatpush1.msra.mxu0 %v1700
    %1757 = vmatprep.subr.mxu0 0.0
    %1758 = vmatpush1.msra.mxu0 %v1701
    %1759 = vmatprep.subr.mxu0 0.0
    %1760 = vmatpush1.msra.mxu0 %v1702
    %1761 = vmatprep.subr.mxu0 0.0
    %1762 = vmatpush1.msra.mxu0 %v1703
    %1763 = vmatprep.subr.mxu0 0.0
    %1764 = vmatpush1.msra.mxu0 %v1704
    %1765 = vmatprep.subr.mxu0 0.0
    %1766 = vmatpush1.msra.mxu0 %v1705
    %1767 = vmatprep.subr.mxu0 0.0
    %1768 = vmatpush1.msra.mxu0 %v1706
    %1769 = vmatprep.subr.mxu0 0.0
    %1770 = vmatpush1.msra.mxu0 %v1707
    %1771 = vmatprep.subr.mxu0 0.0
    %1772 = vmatpush1.msra.mxu0 %v1708
    %1773 = vmatprep.subr.mxu0 0.0
    %1774 = vmatpush1.msra.mxu0 %v1709
    %1775 = vmatprep.mubr.f32.mxu0 %v1645
    %1776 = vmatmul.mubr.f32.gmra.mrb[0].mxu0 %v1644
    %v1777 = vpop.f32.mrb[0].mxu0
    %v1778 = vadd.f32 %v1710, %v1777
    %v1779 = vpop.f32.mrb[0].mxu0
    %1780 = vdwg.mxu0
    %v1781 = vmax.f32 %v1778, 0.0
    %v1782 = vld [vmem:[#allocation7 + $0x188] sm:$0xf]
    %v1783 = vld [vmem:[#allocation7 + $0x194] sm:$0xf]
    %v1784 = vld [vmem:[#allocation7 + $0x1a0] sm:$0xf]
    %v1785 = vld [vmem:[#allocation7 + $0x1ac] sm:$0xf]
    %v1786 = vld [vmem:[#allocation7 + $0x1b8] sm:$0xf]
    %v1787 = vld [vmem:[#allocation7 + $0x1c4] sm:$0xf]
    %v1788 = vld [vmem:[#allocation7 + $0x1d0] sm:$0xf]
    %v1789 = vld [vmem:[#allocation7 + $0x1dc] sm:$0xf]
    %v1790 = vld [vmem:[#allocation7 + $0x1e8] sm:$0xf]
    %v1791 = vld [vmem:[#allocation7 + $0x1f4] sm:$0xf]
    %v1792 = vld [vmem:[#allocation7 + $0x200] sm:$0xf]
    %v1793 = vld [vmem:[#allocation7 + $0x20c] sm:$0xf]
    %v1794 = vld [vmem:[#allocation7 + $0x218] sm:$0xf]
    %v1795 = vld [vmem:[#allocation7 + $0x224] sm:$0xf]
    %v1796 = vld [vmem:[#allocation7 + $0x230] sm:$0xf]
    %v1797 = vld [vmem:[#allocation7 + $0x23c] sm:$0xf]
    %v1798 = vunpack.c.l.bf16 %v1782
    %v1799 = vunpack.c.l.bf16 %v1783
    %v1800 = vunpack.c.l.bf16 %v1784
    %v1801 = vunpack.c.l.bf16 %v1785
    %v1802 = vunpack.c.l.bf16 %v1786
    %v1803 = vunpack.c.l.bf16 %v1787
    %v1804 = vunpack.c.l.bf16 %v1788
    %v1805 = vunpack.c.l.bf16 %v1789
    %v1806 = vunpack.c.l.bf16 %v1790
    %v1807 = vunpack.c.l.bf16 %v1791
    %v1808 = vunpack.c.l.bf16 %v1792
    %v1809 = vunpack.c.l.bf16 %v1793
    %v1810 = vunpack.c.l.bf16 %v1794
    %v1811 = vunpack.c.l.bf16 %v1795
    %v1812 = vunpack.c.l.bf16 %v1796
    %v1813 = vunpack.c.l.bf16 %v1797
    %v1814 = vld [vmem:[#allocation8 + $0x3] ss:$0 sm:$0xff]
    %1815 = vmatprep.subr.mxu0 0.0
    %1816 = vmatpush1.msra.mxu0 %v1798
    %1817 = vmatprep.subr.mxu0 0.0
    %1818 = vmatpush1.msra.mxu0 %v1799
    %1819 = vmatprep.subr.mxu0 0.0
    %1820 = vmatpush1.msra.mxu0 %v1800
    %1821 = vmatprep.subr.mxu0 0.0
    %1822 = vmatpush1.msra.mxu0 %v1801
    %1823 = vmatprep.subr.mxu0 0.0
    %1824 = vmatpush1.msra.mxu0 %v1802
    %1825 = vmatprep.subr.mxu0 0.0
    %1826 = vmatpush1.msra.mxu0 %v1803
    %1827 = vmatprep.subr.mxu0 0.0
    %1828 = vmatpush1.msra.mxu0 %v1804
    %1829 = vmatprep.subr.mxu0 0.0
    %1830 = vmatpush1.msra.mxu0 %v1805
    %1831 = vmatprep.subr.mxu0 0.0
    %1832 = vmatpush1.msra.mxu0 %v1806
    %1833 = vmatprep.subr.mxu0 0.0
    %1834 = vmatpush1.msra.mxu0 %v1807
    %1835 = vmatprep.subr.mxu0 0.0
    %1836 = vmatpush1.msra.mxu0 %v1808
    %1837 = vmatprep.subr.mxu0 0.0
    %1838 = vmatpush1.msra.mxu0 %v1809
    %1839 = vmatprep.subr.mxu0 0.0
    %1840 = vmatpush1.msra.mxu0 %v1810
    %1841 = vmatprep.subr.mxu0 0.0
    %1842 = vmatpush1.msra.mxu0 %v1811
    %1843 = vmatprep.subr.mxu0 0.0
    %1844 = vmatpush1.msra.mxu0 %v1812
    %1845 = vmatprep.subr.mxu0 0.0
    %1846 = vmatpush1.msra.mxu0 %v1813
    %1847 = vmatprep.subr.mxu0 0.0
    %1848 = vmatpush1.msra.mxu0 0.0
    %1849 = vmatprep.subr.mxu0 0.0
    %1850 = vmatpush1.msra.mxu0 0.0
    %1851 = vmatprep.subr.mxu0 0.0
    %1852 = vmatpush1.msra.mxu0 0.0
    %1853 = vmatprep.subr.mxu0 0.0
    %1854 = vmatpush1.msra.mxu0 0.0
    %1855 = vmatprep.subr.mxu0 0.0
    %1856 = vmatpush1.msra.mxu0 0.0
    %1857 = vmatprep.subr.mxu0 0.0
    %1858 = vmatpush1.msra.mxu0 0.0
    %1859 = vmatprep.subr.mxu0 0.0
    %1860 = vmatpush1.msra.mxu0 0.0
    %1861 = vmatprep.subr.mxu0 0.0
    %1862 = vmatpush1.msra.mxu0 0.0
    %1863 = vmatprep.subr.mxu0 0.0
    %1864 = vmatpush1.msra.mxu0 0.0
    %1865 = vmatprep.subr.mxu0 0.0
    %1866 = vmatpush1.msra.mxu0 0.0
    %1867 = vmatprep.subr.mxu0 0.0
    %1868 = vmatpush1.msra.mxu0 0.0
    %1869 = vmatprep.subr.mxu0 0.0
    %1870 = vmatpush1.msra.mxu0 0.0
    %1871 = vmatprep.subr.mxu0 0.0
    %1872 = vmatpush1.msra.mxu0 0.0
    %1873 = vmatprep.subr.mxu0 0.0
    %1874 = vmatpush1.msra.mxu0 0.0
    %1875 = vmatprep.subr.mxu0 0.0
    %1876 = vmatpush1.msra.mxu0 0.0
    %1877 = vmatprep.subr.mxu0 0.0
    %1878 = vmatpush1.msra.mxu0 0.0
    %1879 = vmatprep.mubr.f32.mxu0 0.0
    %1880 = vmatmul.mubr.f32.gmra.mrb[0].mxu0 %v1781
    %v1881 = vpop.f32.mrb[0].mxu0
    %v1882 = vadd.f32 %v1814, %v1881
    %v1883 = vpop.f32.mrb[0].mxu0
    %1884 = vdwg.mxu0
    %v1885 = vmax.f32 %v1882, 0.0
    %v1886 = vld [vmem:[#allocation7 + $0x248] sm:$0xf]
    %v1887 = vld [vmem:[#allocation7 + $0x254] sm:$0xf]
    %v1888 = vld [vmem:[#allocation7 + $0x260] sm:$0xf]
    %v1889 = vld [vmem:[#allocation7 + $0x26c] sm:$0xf]
    %v1890 = vld [vmem:[#allocation7 + $0x278] sm:$0xf]
    %v1891 = vld [vmem:[#allocation7 + $0x284] sm:$0xf]
    %v1892 = vld [vmem:[#allocation7 + $0x290] sm:$0xf]
    %v1893 = vld [vmem:[#allocation7 + $0x29c] sm:$0xf]
    %v1894 = vld [vmem:[#allocation7 + $0x2a8] sm:$0xf]
    %v1895 = vld [vmem:[#allocation7 + $0x2b4] sm:$0xf]
    %v1896 = vld [vmem:[#allocation7 + $0x2c0] sm:$0xf]
    %v1897 = vld [vmem:[#allocation7 + $0x2cc] sm:$0xf]
    %v1898 = vld [vmem:[#allocation7 + $0x2d8] sm:$0xf]
    %v1899 = vld [vmem:[#allocation7 + $0x2e4] sm:$0xf]
    %v1900 = vld [vmem:[#allocation7 + $0x2f0] sm:$0xf]
    %v1901 = vld [vmem:[#allocation7 + $0x2fc] sm:$0xf]
    %v1902 = vunpack.c.l.bf16 %v1886
    %v1903 = vunpack.c.l.bf16 %v1887
    %v1904 = vunpack.c.l.bf16 %v1888
    %v1905 = vunpack.c.l.bf16 %v1889
    %v1906 = vunpack.c.l.bf16 %v1890
    %v1907 = vunpack.c.l.bf16 %v1891
    %v1908 = vunpack.c.l.bf16 %v1892
    %v1909 = vunpack.c.l.bf16 %v1893
    %v1910 = vunpack.c.l.bf16 %v1894
    %v1911 = vunpack.c.l.bf16 %v1895
    %v1912 = vunpack.c.l.bf16 %v1896
    %v1913 = vunpack.c.l.bf16 %v1897
    %v1914 = vunpack.c.l.bf16 %v1898
    %v1915 = vunpack.c.l.bf16 %v1899
    %v1916 = vunpack.c.l.bf16 %v1900
    %v1917 = vunpack.c.l.bf16 %v1901
    %v1918 = vld [vmem:[#allocation8 + $0x4] ss:$0 sm:$0xff]
    %1919 = vmatprep.subr.mxu0 0.0
    %1920 = vmatpush1.msra.mxu0 %v1902
    %1921 = vmatprep.subr.mxu0 0.0
    %1922 = vmatpush1.msra.mxu0 %v1903
    %1923 = vmatprep.subr.mxu0 0.0
    %1924 = vmatpush1.msra.mxu0 %v1904
    %1925 = vmatprep.subr.mxu0 0.0
    %1926 = vmatpush1.msra.mxu0 %v1905
    %1927 = vmatprep.subr.mxu0 0.0
    %1928 = vmatpush1.msra.mxu0 %v1906
    %1929 = vmatprep.subr.mxu0 0.0
    %1930 = vmatpush1.msra.mxu0 %v1907
    %1931 = vmatprep.subr.mxu0 0.0
    %1932 = vmatpush1.msra.mxu0 %v1908
    %1933 = vmatprep.subr.mxu0 0.0
    %1934 = vmatpush1.msra.mxu0 %v1909
    %1935 = vmatprep.subr.mxu0 0.0
    %1936 = vmatpush1.msra.mxu0 %v1910
    %1937 = vmatprep.subr.mxu0 0.0
    %1938 = vmatpush1.msra.mxu0 %v1911
    %1939 = vmatprep.subr.mxu0 0.0
    %1940 = vmatpush1.msra.mxu0 %v1912
    %1941 = vmatprep.subr.mxu0 0.0
    %1942 = vmatpush1.msra.mxu0 %v1913
    %1943 = vmatprep.subr.mxu0 0.0
    %1944 = vmatpush1.msra.mxu0 %v1914
    %1945 = vmatprep.subr.mxu0 0.0
    %1946 = vmatpush1.msra.mxu0 %v1915
    %1947 = vmatprep.subr.mxu0 0.0
    %1948 = vmatpush1.msra.mxu0 %v1916
    %1949 = vmatprep.subr.mxu0 0.0
    %1950 = vmatpush1.msra.mxu0 %v1917
    %1951 = vmatprep.subr.mxu0 0.0
    %1952 = vmatpush1.msra.mxu0 0.0
    %1953 = vmatprep.subr.mxu0 0.0
    %1954 = vmatpush1.msra.mxu0 0.0
    %1955 = vmatprep.subr.mxu0 0.0
    %1956 = vmatpush1.msra.mxu0 0.0
    %1957 = vmatprep.subr.mxu0 0.0
    %1958 = vmatpush1.msra.mxu0 0.0
    %1959 = vmatprep.subr.mxu0 0.0
    %1960 = vmatpush1.msra.mxu0 0.0
    %1961 = vmatprep.subr.mxu0 0.0
    %1962 = vmatpush1.msra.mxu0 0.0
    %1963 = vmatprep.subr.mxu0 0.0
    %1964 = vmatpush1.msra.mxu0 0.0
    %1965 = vmatprep.subr.mxu0 0.0
    %1966 = vmatpush1.msra.mxu0 0.0
    %1967 = vmatprep.subr.mxu0 0.0
    %1968 = vmatpush1.msra.mxu0 0.0
    %1969 = vmatprep.subr.mxu0 0.0
    %1970 = vmatpush1.msra.mxu0 0.0
    %1971 = vmatprep.subr.mxu0 0.0
    %1972 = vmatpush1.msra.mxu0 0.0
    %1973 = vmatprep.subr.mxu0 0.0
    %1974 = vmatpush1.msra.mxu0 0.0
    %1975 = vmatprep.subr.mxu0 0.0
    %1976 = vmatpush1.msra.mxu0 0.0
    %1977 = vmatprep.subr.mxu0 0.0
    %1978 = vmatpush1.msra.mxu0 0.0
    %1979 = vmatprep.subr.mxu0 0.0
    %1980 = vmatpush1.msra.mxu0 0.0
    %1981 = vmatprep.subr.mxu0 0.0
    %1982 = vmatpush1.msra.mxu0 0.0
    %1983 = vmatprep.mubr.f32.mxu0 0.0
    %1984 = vmatmul.mubr.f32.gmra.mrb[0].mxu0 %v1885
    %v1985 = vpop.f32.mrb[0].mxu0
    %v1986 = vadd.f32 %v1918, %v1985
    %v1987 = vpop.f32.mrb[0].mxu0
    %1988 = vdwg.mxu0
    %vm1989 = vcmask 74752
    %1990 = vst.msk [vmem:[#allocation10] sm:$0x3] %vm1989, %v1986
    // Predicated region
    $region34: #{tpu_custom_call.1} parent=1 // pred_check
      _
    $region35: #{tpu_custom_call.1} parent=1 // pred_check_branch
      %1992 = sbr.rel (0) target = $region37
    $region36: #{tpu_custom_call.1} parent=1 // pred_region
      %s1994 = ssub.s32 32, 32
      %1995 = vsyncadd [#allocation4], %s1994
      %s1997 = sshll.u32 [#allocation10], 4
      %s1998 = int_to_ptr.vmem [resolvable:$true] %s1997
      %2000 = dma.vmem_to_hbm [thread:$0]  %s1998, 32, %s4, [#allocation4]
    $region37: #{tpu_custom_call.1} parent=1 // pred_fallthru
      _
    // Predicated region
    $region38: #{tpu_custom_call.1} parent=1 // pred_check
      _
    $region39: #{tpu_custom_call.1} parent=1 // pred_check_branch
      %2002 = sbr.rel (0) target = $region41
    $region40: #{tpu_custom_call.1} parent=1 // pred_region
      %2003 = dma.done [#allocation4], 32
    $region41: #{tpu_custom_call.1} parent=1 // pred_fallthru
      _
    %2004 = vsyncpa [#allocation3], 1
    %2005 = vsyncpa [#allocation6], 1
    %2006 = vsyncpa [#allocation9], 1
    %2007 = vsyncpa [#allocation4], 1

</llo_original>
